<compile_context>
chip_gen: v7x
topology: tpu7x:2x2x1
jax: 0.10.0
libtpu: 0.0.40
codegen_flags: <defaults>
</compile_context>

<pallas_src>
import math
from functools import partial

import numpy as np
import jax
import jax.numpy as jnp
from jax import lax
from jax.experimental import pallas as pl
from jax.experimental.pallas import tpu as pltpu

LANE = 128

# ----------------------------------------------------------------------------
# Geometric-algebra constants: G(3,0,1), basis ordering
# [1, e0, e1, e2, e3, e01, e02, e03, e12, e13, e23, e012, e013, e023, e123, e0123]
# ----------------------------------------------------------------------------
_GRADES = np.array([0, 1, 1, 1, 1, 2, 2, 2, 2, 2, 2, 3, 3, 3, 3, 4])
# blades NOT containing e0 -> participate in the invariant inner product
_IP_IDX = np.array([0, 2, 3, 4, 8, 9, 10, 14])
# e0 * blade (geometric product) for the non-e0 blades: (src -> dst), coeff +1
_E0_PAIRS = [(0, 1), (2, 5), (3, 6), (4, 7), (8, 11), (9, 12), (10, 13), (14, 15)]
NUM_BASIS = 9  # 5 grade projections + 4 "multiply by e0" maps


def _round_up(x, m):
    return (x + m - 1) // m * m


def make_equi_basis():
    basis = np.zeros((NUM_BASIS, 16, 16), dtype=np.float32)  # [map, out_blade, in_blade]
    for g in range(5):
        for i in range(16):
            if _GRADES[i] == g:
                basis[g, i, i] = 1.0
    for src, dst in _E0_PAIRS:
        basis[5 + _GRADES[src], dst, src] = 1.0
    return jnp.asarray(basis)


# ----------------------------------------------------------------------------
# Config (mirrors SelfAttentionConfig fields actually used by CrossAttention)
# ----------------------------------------------------------------------------
class SelfAttentionConfig:
    multi_query = True
    additional_qk_mv_channels = 0
    additional_qk_s_channels = 0
    pos_encoding = False
    num_heads = 4
    in_mv_channels = 4
    out_mv_channels = 4
    hidden_mv_channels = 4
    in_s_channels = 4
    out_s_channels = 4
    hidden_s_channels = 8
    output_init = "default"
    dropout_prob = None  # -> no GradeDropout


# ----------------------------------------------------------------------------
# EquiLinear as a dense (Fin, Fout) matrix + bias
# ----------------------------------------------------------------------------
def init_equi_linear(key, in_mv, out_mv, in_s, out_s, basis):
    k1, k2, k3, k4, k5, k6 = jax.random.split(key, 6)
    w_mv = jax.random.normal(k1, (out_mv, in_mv, NUM_BASIS)) / math.sqrt(NUM_BASIS * in_mv)
    w_s2mv = jax.random.normal(k2, (out_mv, in_s)) / math.sqrt(in_s)
    b_s2mv = 0.01 * jax.random.normal(k3, (out_mv,))
    w_mvs2s = jax.random.normal(k4, (out_s, in_mv)) / math.sqrt(in_mv)
    w_s2s = jax.random.normal(k5, (out_s, in_s)) / math.sqrt(in_s)
    b_s = 0.01 * jax.random.normal(k6, (out_s,))

    fin = in_mv * 16 + in_s
    fout = out_mv * 16 + out_s
    W = jnp.zeros((fin, fout), jnp.float32)

    # mv -> mv through the 9 equivariant basis maps
    mvmv = jnp.einsum("oia,ayx->ixoy", w_mv, basis).reshape(in_mv * 16, out_mv * 16)
    W = W.at[: in_mv * 16, : out_mv * 16].set(mvmv)
    # scalars -> scalar (grade-0) component of output multivectors
    s2mv = jnp.zeros((in_s, out_mv, 16)).at[:, :, 0].set(w_s2mv.T).reshape(in_s, out_mv * 16)
    W = W.at[in_mv * 16 :, : out_mv * 16].set(s2mv)
    # scalar component of input multivectors -> output scalars
    mvs2s = jnp.zeros((in_mv, 16, out_s)).at[:, 0, :].set(w_mvs2s.T).reshape(in_mv * 16, out_s)
    W = W.at[: in_mv * 16, out_mv * 16 :].set(mvs2s)
    # scalars -> scalars
    W = W.at[in_mv * 16 :, out_mv * 16 :].set(w_s2s.T)

    b_mv = jnp.zeros((out_mv, 16)).at[:, 0].set(b_s2mv).reshape(out_mv * 16)
    bias = jnp.concatenate([b_mv, b_s]).astype(jnp.float32)
    return {"W": W.astype(jnp.float32), "b": bias}


# ----------------------------------------------------------------------------
# Fold everything into kernel-ready, lane-padded bf16 operands (init time, once)
# ----------------------------------------------------------------------------
def build_fused_weights(dense, cfg, in_q_mv, in_q_s):
    H = cfg.num_heads
    hid_mv, hid_s = cfg.hidden_mv_channels, cfg.hidden_s_channels
    out_mv, out_s = cfg.out_mv_channels, cfg.out_s_channels
    ip = _IP_IDX
    dq = hid_mv * 8 + hid_s            # invariant-blade + scalar q/k feature dim
    dv = hid_mv * 16 + hid_s           # full-mv + scalar value feature dim
    dqp, dvp = _round_up(dq, LANE), _round_up(dv, LANE)
    fout = out_mv * 16 + out_s
    foutp = _round_up(fout, LANE)
    fin_q = in_q_mv * 16 + in_q_s
    fin_kv = cfg.in_mv_channels * 16 + cfg.in_s_channels
    # +1 lane for the constant-1 "bias" input feature (biases folded into W)
    fqp = _round_up(fin_q + 1, LANE)
    fkvp = _round_up(fin_kv + 1, LANE)
    scale = 1.0 / math.sqrt(dq)

    wq_d, bq_d = np.asarray(dense["q"]["W"]), np.asarray(dense["q"]["b"])
    wk_d, bk_d = np.asarray(dense["k"]["W"]), np.asarray(dense["k"]["b"])
    wv_d, bv_d = np.asarray(dense["v"]["W"]), np.asarray(dense["v"]["b"])
    wo_d, bo_d = np.asarray(dense["out"]["W"]), np.asarray(dense["out"]["b"])

    def qk_cols(head, nheads):
        """Dense-output column index for each q/k attention feature of one head."""
        cols = np.empty((dq,), np.int64)
        for c in range(hid_mv):
            for bi in range(8):
                cols[c * 8 + bi] = (c * nheads + head) * 16 + ip[bi]
        for c in range(hid_s):
            cols[hid_mv * 8 + c] = (hid_mv * nheads) * 16 + c * nheads + head
        return cols

    # --- Q: head-BLOCK-DIAGONAL on the input axis, so heads land on separate
    #     ROWS of the projection output -> one score matmul covers all heads.
    #     Blade selection, 1/sqrt(dq) scale and the bias (via the 1-lane) folded in.
    wq = np.zeros((H * fqp, dqp), np.float32)
    for h in range(H):
        cols = qk_cols(h, H)
        wq[h * fqp : h * fqp + fin_q, :dq] = wq_d[:, cols] * scale
        wq[h * fqp + fin_q, :dq] = bq_d[cols] * scale

    # --- K (multi-query -> single head) and V share their input: one fused matmul.
    cols = qk_cols(0, 1)
    wkv = np.zeros((fkvp, dqp + dvp), np.float32)
    wkv[:fin_kv, :dq] = wk_d[:, cols]
    wkv[fin_kv, :dq] = bk_d[cols]
    wkv[:fin_kv, dqp : dqp + dv] = wv_d
    wkv[fin_kv, dqp : dqp + dv] = bv_d

    # --- Out: rows permuted/padded so the head-major lane-concat of the (padded)
    #     per-head attention outputs feeds it directly.
    wo = np.zeros((H * dvp, foutp), np.float32)
    for h in range(H):
        rows = np.empty((dv,), np.int64)
        rows[: hid_mv * 16] = h * hid_mv * 16 + np.arange(hid_mv * 16)
        rows[hid_mv * 16 :] = H * hid_mv * 16 + h * hid_s + np.arange(hid_s)
        wo[h * dvp : h * dvp + dv, :fout] = wo_d[rows, :]
    bo = np.zeros((1, foutp), np.float32)
    bo[0, :fout] = bo_d

    # Weights stored bf16 (half the DMA/VMEM; MXU operands are bf16 anyway);
    # the remaining output bias stays f32.  Only arrays here (jit-safe pytree).
    return {
        "wq": jnp.asarray(wq, jnp.bfloat16),
        "wkv": jnp.asarray(wkv, jnp.bfloat16),
        "wout": jnp.asarray(wo, jnp.bfloat16),
        "bout": jnp.asarray(bo, jnp.float32),
    }


def init_cross_attention_params(key, cfg, in_q_mv_channels, in_q_s_channels):
    assert cfg.multi_query, "Cross attention is only implemented with multi query"
    assert cfg.additional_qk_mv_channels == 0 and cfg.additional_qk_s_channels == 0
    assert not cfg.pos_encoding
    basis = make_equi_basis()
    H = cfg.num_heads
    hid_mv, hid_s = cfg.hidden_mv_channels, cfg.hidden_s_channels
    kq, kk, kv, ko = jax.random.split(key, 4)
    dense = {
        "q": init_equi_linear(kq, in_q_mv_channels, hid_mv * H,
                              in_q_s_channels, hid_s * H, basis),
        "k": init_equi_linear(kk, cfg.in_mv_channels, hid_mv,
                              cfg.in_s_channels, hid_s, basis),
        "v": init_equi_linear(kv, cfg.in_mv_channels, hid_mv,
                              cfg.in_s_channels, hid_s, basis),
        "out": init_equi_linear(ko, hid_mv * H, cfg.out_mv_channels,
                                hid_s * H, cfg.out_s_channels, basis),
    }
    fused = build_fused_weights(dense, cfg, in_q_mv_channels, in_q_s_channels)
    return {"dense": dense, "fused": fused}


# ----------------------------------------------------------------------------
# Grid sizing: 2 batch blocks on v7x (2 TensorCores), 1 on single-TC v5e/v6e
# ----------------------------------------------------------------------------
def _num_batch_blocks(B):
    try:
        kind = jax.devices()[0].device_kind.lower().replace(" ", "")
        n_tc = 2 if ("v7" in kind or "7x" in kind) else 1
    except Exception:
        n_tc = 1
    return max(1, math.gcd(B, n_tc))


# ----------------------------------------------------------------------------
# The single fused Pallas kernel
# ----------------------------------------------------------------------------
def cross_attention_pallas(xq_bd, xkv, fused, *, B, Nq, Nk, H, dqp, num_blocks):
    Hfqp = fused["wq"].shape[0]
    fkvp = fused["wkv"].shape[0]
    foutp = fused["wout"].shape[1]
    Bblk = B // num_blocks
    HNq = H * Nq

    def kernel(xq_ref, xkv_ref, wq_ref, wkv_ref, wout_ref, bout_ref, o_ref):
        bf16, f32 = jnp.bfloat16, jnp.float32

        # Q projection: ONE matmul yields per-(batch, head, query) rows; blade
        # selection, 1/sqrt(dq) scale and bias are already inside wq.
        qf = jnp.dot(xq_ref[...], wq_ref[...],
                     preferred_element_type=f32)                  # (Bblk*H*Nq, dqp)
        # Fused K+V projection (shared input, biases folded in via the 1-lane).
        # TODO(synk): could also be block-diagonally fused with the Q matmul
        # (K = Hfqp + fkvp) to save one more MXU launch on v6e.
        kvf = jnp.dot(xkv_ref[...], wkv_ref[...],
                      preferred_element_type=f32)                 # (Bblk*Nk, dqp+dvp)

        o_parts, l_parts = [], []
        for b in range(Bblk):                     # unrolled; Bblk is 1 or 2
            qb = qf[b * HNq:(b + 1) * HNq].astype(bf16)           # (H*Nq, dqp)
            kvb = kvf[b * Nk:(b + 1) * Nk]
            kb = kvb[:, :dqp].astype(bf16)                        # (Nk, dqp)
            vb = kvb[:, dqp:].astype(bf16)                        # (Nk, dvp)
            # all H heads in ONE score matmul; K^T folded into the dot_general.
            s = lax.dot_general(qb, kb, (((1,), (1,)), ((), ())),
                                preferred_element_type=f32)       # (H*Nq, Nk)
            m = jnp.max(s, axis=-1, keepdims=True)
            p = jnp.exp(s - m)
            l_parts.append(jnp.sum(p, axis=-1, keepdims=True))
            o_parts.append(jnp.dot(p.astype(bf16), vb,
                                   preferred_element_type=f32))   # (H*Nq, dvp)
        o_all = o_parts[0] if Bblk == 1 else jnp.concatenate(o_parts, axis=0)
        l_all = l_parts[0] if Bblk == 1 else jnp.concatenate(l_parts, axis=0)
        # Single softmax normalization for all heads/batches, kept in f32
        # (exact reciprocal) until the one bf16 cast feeding the out projection.
        o_all = o_all * pl.reciprocal(l_all, approx=False)

        # heads: rows -> 128-lane-aligned slots (static, 8-aligned sublane slices).
        rows = []
        for b in range(Bblk):
            ob = o_all[b * HNq:(b + 1) * HNq]
            rows.append(jnp.concatenate(
                [ob[h * Nq:(h + 1) * Nq] for h in range(H)], axis=-1))  # (Nq, H*dvp)
        att = (rows[0] if Bblk == 1 else jnp.concatenate(rows, axis=0)).astype(bf16)

        # Output projection (rows of wout pre-permuted) + bias; lane-dense store.
        y = jnp.dot(att, wout_ref[...], preferred_element_type=f32) + bout_ref[...]
        o_ref[...] = y.astype(o_ref.dtype)                        # (Bblk*Nq, foutp)

    return pl.pallas_call(
        kernel,
        out_shape=jax.ShapeDtypeStruct((B * Nq, foutp), jnp.float32),
        grid=(num_blocks,),
        in_specs=[
            pl.BlockSpec((Bblk * HNq, Hfqp), lambda i: (i, 0)),
            pl.BlockSpec((Bblk * Nk, fkvp), lambda i: (i, 0)),
            pl.BlockSpec(fused["wq"].shape, lambda i: (0, 0)),
            pl.BlockSpec(fused["wkv"].shape, lambda i: (0, 0)),
            pl.BlockSpec(fused["wout"].shape, lambda i: (0, 0)),
            pl.BlockSpec(fused["bout"].shape, lambda i: (0, 0)),
        ],
        out_specs=pl.BlockSpec((Bblk * Nq, foutp), lambda i: (i, 0)),
        compiler_params=pltpu.CompilerParams(
            dimension_semantics=("parallel",)),   # 2 blocks -> both v7x TCs busy
    )(xq_bd, xkv, fused["wq"], fused["wkv"], fused["wout"], fused["bout"])


# ----------------------------------------------------------------------------
# Forward
# ----------------------------------------------------------------------------
def _pack_features(mv, s, fin, fpad):
    """[flattened multivectors | scalars | 1 | 0-pad] -> (..., fpad) in bf16.
    The constant-1 lane lets the projection biases live inside the weights."""
    lead = mv.shape[:-2]
    x = jnp.concatenate([mv.reshape(lead + (-1,)), s], axis=-1)
    assert x.shape[-1] == fin
    parts = [x, jnp.ones(lead + (1,), x.dtype)]
    pad = fpad - fin - 1
    if pad:
        parts.append(jnp.zeros(lead + (pad,), x.dtype))
    return jnp.concatenate(parts, axis=-1).astype(jnp.bfloat16)


def cross_attention_forward(cfg, params, multivectors_kv, multivectors_q,
                            scalars_kv, scalars_q, attention_mask=None):
    # TODO(synk): attention_mask (dense / xformers block mask) is not supported.
    assert attention_mask is None
    fused = params["fused"]
    H = cfg.num_heads
    hid_mv, hid_s = cfg.hidden_mv_channels, cfg.hidden_s_channels
    out_mv_ch, out_s_ch = cfg.out_mv_channels, cfg.out_s_channels

    B, Nq = multivectors_q.shape[:2]
    Nk = multivectors_kv.shape[1]
    # TODO(synk): pad Nq/Nk if they are ever not sublane (8) multiples.
    assert Nq % 8 == 0 and Nk % 8 == 0, "Nq/Nk must be multiples of 8"

    dqp = _round_up(hid_mv * 8 + hid_s, LANE)
    fin_q = multivectors_q.shape[2] * 16 + scalars_q.shape[-1]
    fin_kv = multivectors_kv.shape[2] * 16 + scalars_kv.shape[-1]
    fqp = _round_up(fin_q + 1, LANE)
    fkvp = _round_up(fin_kv + 1, LANE)
    assert fused["wq"].shape[0] == H * fqp and fused["wkv"].shape[0] == fkvp

    xq = _pack_features(multivectors_q, scalars_q, fin_q, fqp)        # (B, Nq, fqp)
    xkv = _pack_features(multivectors_kv, scalars_kv, fin_kv, fkvp)   # (B, Nk, fkvp)

    # Head-block-diagonal query input: row (b, h, q) carries xq[b, q] in column
    # block h, so one matmul against the head-stacked wq gives per-head query
    # rows and scores/softmax/PV each run once for all heads.
    eye = jnp.eye(H, dtype=xq.dtype)
    xq_bd = (xq[:, None, :, None, :] * eye[None, :, None, :, None]
             ).reshape(B * H * Nq, H * fqp)
    xkv2 = xkv.reshape(B * Nk, fkvp)

    num_blocks = _num_batch_blocks(B)
    y = cross_attention_pallas(xq_bd, xkv2, fused, B=B, Nq=Nq, Nk=Nk, H=H,
                               dqp=dqp, num_blocks=num_blocks)        # (B*Nq, foutp)
    y = y.reshape(B, Nq, -1)
    out_mv = y[..., : out_mv_ch * 16].reshape(B, Nq, out_mv_ch, 16)
    out_s = y[..., out_mv_ch * 16 : out_mv_ch * 16 + out_s_ch]
    # cfg.dropout_prob is None -> no GradeDropout
    return out_mv, out_s


# ----------------------------------------------------------------------------
# Pure-JAX f32 reference (for validation of the fused-weight construction)
# ----------------------------------------------------------------------------
def cross_attention_reference(cfg, params, mv_kv, mv_q, s_kv, s_q):
    d = params["dense"]
    H, hid_mv, hid_s = cfg.num_heads, cfg.hidden_mv_channels, cfg.hidden_s_channels
    B, Nq = mv_q.shape[:2]
    Nk = mv_kv.shape[1]

    def lin(p, mv, s, n_out_mv):
        lead = mv.shape[:-2]
        x = jnp.concatenate([mv.reshape(lead + (-1,)), s], axis=-1)
        y = x @ p["W"] + p["b"]
        return (y[..., : n_out_mv * 16].reshape(lead + (n_out_mv, 16)),
                y[..., n_out_mv * 16 :])

    q_mv, q_s = lin(d["q"], mv_q, s_q, hid_mv * H)
    k_mv, k_s = lin(d["k"], mv_kv, s_kv, hid_mv)
    v_mv, v_s = lin(d["v"], mv_kv, s_kv, hid_mv)

    q_mv = q_mv.reshape(B, Nq, hid_mv, H, 16).transpose(0, 3, 1, 2, 4)
    q_s = q_s.reshape(B, Nq, hid_s, H).transpose(0, 3, 1, 2)
    ip = jnp.asarray(_IP_IDX)
    qf = jnp.concatenate(
        [jnp.take(q_mv, ip, axis=-1).reshape(B, H, Nq, hid_mv * 8), q_s], axis=-1)
    kf = jnp.concatenate(
        [jnp.take(k_mv, ip, axis=-1).reshape(B, Nk, hid_mv * 8), k_s], axis=-1)
    vf = jnp.concatenate([v_mv.reshape(B, Nk, hid_mv * 16), v_s], axis=-1)

    scale = 1.0 / math.sqrt(qf.shape[-1])
    att = jax.nn.softmax(jnp.einsum("bhqd,bkd->bhqk", qf, kf) * scale, axis=-1)
    o = jnp.einsum("bhqk,bkd->bhqd", att, vf)

    h_mv = o[..., : hid_mv * 16].reshape(B, H, Nq, hid_mv, 16)
    h_mv = h_mv.transpose(0, 2, 1, 3, 4).reshape(B, Nq, H * hid_mv, 16)
    h_s = o[..., hid_mv * 16 :].transpose(0, 2, 1, 3).reshape(B, Nq, H * hid_s)
    return lin(d["out"], h_mv, h_s, cfg.out_mv_channels)


# ----------------------------------------------------------------------------
# main
# ----------------------------------------------------------------------------
if __name__ == "__main__":
    cfg = SelfAttentionConfig()
    in_q_mv_channels, in_q_s_channels = 4, 4

    key = jax.random.PRNGKey(0)
    kp, k1, k2, k3, k4 = jax.random.split(key, 5)
    params = init_cross_attention_params(kp, cfg, in_q_mv_channels, in_q_s_channels)

    B, Nq, Nkv = 2, 8, 16
    multivectors_kv = jax.random.normal(k1, (B, Nkv, cfg.in_mv_channels, 16), jnp.float32)
    multivectors_q = jax.random.normal(k2, (B, Nq, in_q_mv_channels, 16), jnp.float32)
    scalars_kv = jax.random.normal(k3, (B, Nkv, cfg.in_s_channels), jnp.float32)
    scalars_q = jax.random.normal(k4, (B, Nq, in_q_s_channels), jnp.float32)

    fwd = jax.jit(partial(cross_attention_forward, cfg))
    out_mv, out_s = fwd(params, multivectors_kv, multivectors_q, scalars_kv, scalars_q)
    jax.block_until_ready((out_mv, out_s))

    assert out_mv.shape == (B, Nq, cfg.out_mv_channels, 16), out_mv.shape
    assert out_s.shape == (B, Nq, cfg.out_s_channels), out_s.shape
    assert bool(jnp.all(jnp.isfinite(out_mv))) and bool(jnp.all(jnp.isfinite(out_s)))

    # Validate against the pure-JAX f32 reference.  Tolerance tightened vs the
    # previous version (f32 softmax normalization, exact reciprocal); residual
    # drift is from bf16 MXU operands / bf16-stored weights.
    ref_mv, ref_s = cross_attention_reference(
        cfg, params, multivectors_kv, multivectors_q, scalars_kv, scalars_q)
    np.testing.assert_allclose(np.asarray(out_mv), np.asarray(ref_mv), rtol=5e-2, atol=5e-2)
    np.testing.assert_allclose(np.asarray(out_s), np.asarray(ref_s), rtol=5e-2, atol=5e-2)

    print("KERNEL_OK")
</pallas_src>

<mosaic_0001>
module attributes {stable_mosaic.version = 11 : i64} {
  func.func @kernel(%arg0: i32, %arg1: memref<64x512xbf16, #tpu.memory_space<vmem>>, %arg2: memref<32x128xbf16, #tpu.memory_space<vmem>>, %arg3: memref<512x128xbf16, #tpu.memory_space<vmem>>, %arg4: memref<128x256xbf16, #tpu.memory_space<vmem>>, %arg5: memref<512x128xbf16, #tpu.memory_space<vmem>>, %arg6: memref<1x128xf32, #tpu.memory_space<vmem>>, %arg7: memref<16x128xf32, #tpu.memory_space<vmem>>) attributes {dimension_semantics = [#tpu.dimension_semantics<parallel>], iteration_bounds = array<i64: 1>, scalar_prefetch = 0 : i64, scratch_operands = 0 : i64, tpu.core_type = #tpu.core_type<tc>, window_params = [{transform_indices = @transform_0, window_bounds = array<i64: 64, 512>}, {transform_indices = @transform_1, window_bounds = array<i64: 32, 128>}, {pipeline_mode = #tpu.pipeline_mode<synchronous>, transform_indices = @transform_2, window_bounds = array<i64: 512, 128>}, {pipeline_mode = #tpu.pipeline_mode<synchronous>, transform_indices = @transform_3, window_bounds = array<i64: 128, 256>}, {pipeline_mode = #tpu.pipeline_mode<synchronous>, transform_indices = @transform_4, window_bounds = array<i64: 512, 128>}, {pipeline_mode = #tpu.pipeline_mode<synchronous>, transform_indices = @transform_5, window_bounds = array<i64: 1, 128>}, {transform_indices = @transform_6, window_bounds = array<i64: 16, 128>}]} {
    %c0 = arith.constant 0 : index
    %c0_0 = arith.constant 0 : index
    %0 = vector.load %arg1[%c0, %c0_0] : memref<64x512xbf16, #tpu.memory_space<vmem>>, vector<64x512xbf16>
    %c0_1 = arith.constant 0 : index
    %c0_2 = arith.constant 0 : index
    %1 = vector.load %arg3[%c0_1, %c0_2] : memref<512x128xbf16, #tpu.memory_space<vmem>>, vector<512x128xbf16>
    %cst = arith.constant dense<0.000000e+00> : vector<64x128xf32>
    %2 = tpu.matmul %0, %1, %cst {dimension_numbers = #tpu.dot_dimension_numbers<[1], [0], [0], [1], [0, 0, 1, 1], [], []>} : vector<64x512xbf16>, vector<512x128xbf16>, vector<64x128xf32> -> vector<64x128xf32>
    %c0_3 = arith.constant 0 : index
    %c0_4 = arith.constant 0 : index
    %3 = vector.load %arg2[%c0_3, %c0_4] : memref<32x128xbf16, #tpu.memory_space<vmem>>, vector<32x128xbf16>
    %c0_5 = arith.constant 0 : index
    %c0_6 = arith.constant 0 : index
    %4 = vector.load %arg4[%c0_5, %c0_6] : memref<128x256xbf16, #tpu.memory_space<vmem>>, vector<128x256xbf16>
    %cst_7 = arith.constant dense<0.000000e+00> : vector<32x256xf32>
    %5 = tpu.matmul %3, %4, %cst_7 {dimension_numbers = #tpu.dot_dimension_numbers<[1], [0], [0], [1], [0, 0, 1, 1], [], []>} : vector<32x128xbf16>, vector<128x256xbf16>, vector<32x256xf32> -> vector<32x256xf32>
    %6 = vector.extract_strided_slice %2 {offsets = [0, 0], sizes = [32, 128], strides = [1, 1]} : vector<64x128xf32> to vector<32x128xf32>
    %7 = arith.truncf %6 : vector<32x128xf32> to vector<32x128xbf16>
    %8 = vector.extract_strided_slice %5 {offsets = [0, 0], sizes = [16, 256], strides = [1, 1]} : vector<32x256xf32> to vector<16x256xf32>
    %9 = vector.extract_strided_slice %8 {offsets = [0, 0], sizes = [16, 128], strides = [1, 1]} : vector<16x256xf32> to vector<16x128xf32>
    %10 = arith.truncf %9 : vector<16x128xf32> to vector<16x128xbf16>
    %11 = vector.extract_strided_slice %8 {offsets = [0, 128], sizes = [16, 128], strides = [1, 1]} : vector<16x256xf32> to vector<16x128xf32>
    %12 = arith.truncf %11 : vector<16x128xf32> to vector<16x128xbf16>
    %cst_8 = arith.constant dense<0.000000e+00> : vector<32x16xf32>
    %13 = tpu.matmul %7, %10, %cst_8 {dimension_numbers = #tpu.dot_dimension_numbers<[1], [1], [0], [0], [0, 0, 1, 0], [], []>} : vector<32x128xbf16>, vector<16x128xbf16>, vector<32x16xf32> -> vector<32x16xf32>
    %cst_9 = arith.constant dense<0xFF800000> : vector<32xf32>
    %14 = vector.multi_reduction <maximumf>, %13, %cst_9 [1] : vector<32x16xf32> to vector<32xf32>
    %15 = vector.shape_cast %14 : vector<32xf32> to vector<32x1xf32>
    %16 = vector.broadcast %15 : vector<32x1xf32> to vector<32x16xf32>
    %17 = arith.subf %13, %16 : vector<32x16xf32>
    %18 = math.exp %17 : vector<32x16xf32>
    %cst_10 = arith.constant dense<0.000000e+00> : vector<32xf32>
    %19 = vector.multi_reduction <add>, %18, %cst_10 [1] : vector<32x16xf32> to vector<32xf32>
    %20 = vector.shape_cast %19 : vector<32xf32> to vector<32x1xf32>
    %21 = arith.truncf %18 : vector<32x16xf32> to vector<32x16xbf16>
    %cst_11 = arith.constant dense<0.000000e+00> : vector<32x128xf32>
    %22 = tpu.matmul %21, %12, %cst_11 {dimension_numbers = #tpu.dot_dimension_numbers<[1], [0], [0], [1], [0, 0, 1, 1], [], []>} : vector<32x16xbf16>, vector<16x128xbf16>, vector<32x128xf32> -> vector<32x128xf32>
    %23 = vector.extract_strided_slice %2 {offsets = [32, 0], sizes = [32, 128], strides = [1, 1]} : vector<64x128xf32> to vector<32x128xf32>
    %24 = arith.truncf %23 : vector<32x128xf32> to vector<32x128xbf16>
    %25 = vector.extract_strided_slice %5 {offsets = [16, 0], sizes = [16, 256], strides = [1, 1]} : vector<32x256xf32> to vector<16x256xf32>
    %26 = vector.extract_strided_slice %25 {offsets = [0, 0], sizes = [16, 128], strides = [1, 1]} : vector<16x256xf32> to vector<16x128xf32>
    %27 = arith.truncf %26 : vector<16x128xf32> to vector<16x128xbf16>
    %28 = vector.extract_strided_slice %25 {offsets = [0, 128], sizes = [16, 128], strides = [1, 1]} : vector<16x256xf32> to vector<16x128xf32>
    %29 = arith.truncf %28 : vector<16x128xf32> to vector<16x128xbf16>
    %cst_12 = arith.constant dense<0.000000e+00> : vector<32x16xf32>
    %30 = tpu.matmul %24, %27, %cst_12 {dimension_numbers = #tpu.dot_dimension_numbers<[1], [1], [0], [0], [0, 0, 1, 0], [], []>} : vector<32x128xbf16>, vector<16x128xbf16>, vector<32x16xf32> -> vector<32x16xf32>
    %cst_13 = arith.constant dense<0xFF800000> : vector<32xf32>
    %31 = vector.multi_reduction <maximumf>, %30, %cst_13 [1] : vector<32x16xf32> to vector<32xf32>
    %32 = vector.shape_cast %31 : vector<32xf32> to vector<32x1xf32>
    %33 = vector.broadcast %32 : vector<32x1xf32> to vector<32x16xf32>
    %34 = arith.subf %30, %33 : vector<32x16xf32>
    %35 = math.exp %34 : vector<32x16xf32>
    %cst_14 = arith.constant dense<0.000000e+00> : vector<32xf32>
    %36 = vector.multi_reduction <add>, %35, %cst_14 [1] : vector<32x16xf32> to vector<32xf32>
    %37 = vector.shape_cast %36 : vector<32xf32> to vector<32x1xf32>
    %38 = arith.truncf %35 : vector<32x16xf32> to vector<32x16xbf16>
    %cst_15 = arith.constant dense<0.000000e+00> : vector<32x128xf32>
    %39 = tpu.matmul %38, %29, %cst_15 {dimension_numbers = #tpu.dot_dimension_numbers<[1], [0], [0], [1], [0, 0, 1, 1], [], []>} : vector<32x16xbf16>, vector<16x128xbf16>, vector<32x128xf32> -> vector<32x128xf32>
    %40 = tpu.concatenate %22, %39 in 0 : vector<32x128xf32>, vector<32x128xf32> -> vector<64x128xf32>
    %41 = tpu.concatenate %20, %37 in 0 : vector<32x1xf32>, vector<32x1xf32> -> vector<64x1xf32>
    %42 = tpu.reciprocal %41 : vector<64x1xf32> -> vector<64x1xf32>
    %43 = vector.broadcast %42 : vector<64x1xf32> to vector<64x128xf32>
    %44 = arith.mulf %40, %43 : vector<64x128xf32>
    %45 = vector.extract_strided_slice %44 {offsets = [0, 0], sizes = [32, 128], strides = [1, 1]} : vector<64x128xf32> to vector<32x128xf32>
    %46 = vector.extract_strided_slice %45 {offsets = [0, 0], sizes = [8, 128], strides = [1, 1]} : vector<32x128xf32> to vector<8x128xf32>
    %47 = vector.extract_strided_slice %45 {offsets = [8, 0], sizes = [8, 128], strides = [1, 1]} : vector<32x128xf32> to vector<8x128xf32>
    %48 = vector.extract_strided_slice %45 {offsets = [16, 0], sizes = [8, 128], strides = [1, 1]} : vector<32x128xf32> to vector<8x128xf32>
    %49 = vector.extract_strided_slice %45 {offsets = [24, 0], sizes = [8, 128], strides = [1, 1]} : vector<32x128xf32> to vector<8x128xf32>
    %50 = tpu.concatenate %46, %47, %48, %49 in 1 : vector<8x128xf32>, vector<8x128xf32>, vector<8x128xf32>, vector<8x128xf32> -> vector<8x512xf32>
    %51 = vector.extract_strided_slice %44 {offsets = [32, 0], sizes = [32, 128], strides = [1, 1]} : vector<64x128xf32> to vector<32x128xf32>
    %52 = vector.extract_strided_slice %51 {offsets = [0, 0], sizes = [8, 128], strides = [1, 1]} : vector<32x128xf32> to vector<8x128xf32>
    %53 = vector.extract_strided_slice %51 {offsets = [8, 0], sizes = [8, 128], strides = [1, 1]} : vector<32x128xf32> to vector<8x128xf32>
    %54 = vector.extract_strided_slice %51 {offsets = [16, 0], sizes = [8, 128], strides = [1, 1]} : vector<32x128xf32> to vector<8x128xf32>
    %55 = vector.extract_strided_slice %51 {offsets = [24, 0], sizes = [8, 128], strides = [1, 1]} : vector<32x128xf32> to vector<8x128xf32>
    %56 = tpu.concatenate %52, %53, %54, %55 in 1 : vector<8x128xf32>, vector<8x128xf32>, vector<8x128xf32>, vector<8x128xf32> -> vector<8x512xf32>
    %57 = tpu.concatenate %50, %56 in 0 : vector<8x512xf32>, vector<8x512xf32> -> vector<16x512xf32>
    %58 = arith.truncf %57 : vector<16x512xf32> to vector<16x512xbf16>
    %c0_16 = arith.constant 0 : index
    %c0_17 = arith.constant 0 : index
    %59 = vector.load %arg5[%c0_16, %c0_17] : memref<512x128xbf16, #tpu.memory_space<vmem>>, vector<512x128xbf16>
    %cst_18 = arith.constant dense<0.000000e+00> : vector<16x128xf32>
    %60 = tpu.matmul %58, %59, %cst_18 {dimension_numbers = #tpu.dot_dimension_numbers<[1], [0], [0], [1], [0, 0, 1, 1], [], []>} : vector<16x512xbf16>, vector<512x128xbf16>, vector<16x128xf32> -> vector<16x128xf32>
    %c0_19 = arith.constant 0 : index
    %c0_20 = arith.constant 0 : index
    %61 = vector.load %arg6[%c0_19, %c0_20] : memref<1x128xf32, #tpu.memory_space<vmem>>, vector<1x128xf32>
    %62 = vector.broadcast %61 : vector<1x128xf32> to vector<16x128xf32>
    %63 = arith.addf %60, %62 : vector<16x128xf32>
    %c0_21 = arith.constant 0 : index
    %c0_22 = arith.constant 0 : index
    %64 = vector.load %arg7[%c0_21, %c0_22] : memref<16x128xf32, #tpu.memory_space<vmem>>, vector<16x128xf32>
    tpu.vector_store %arg7[%c0_21, %c0_22], %63 {strides = array<i32>} : memref<16x128xf32, #tpu.memory_space<vmem>>, vector<16x128xf32>,
    return
  }
  func.func @transform_0(%arg0: i32) -> (i32, i32) {
    %c0_i32 = arith.constant 0 : i32
    %c0_i32_0 = arith.constant 0 : i32
    return %arg0, %c0_i32 : i32, i32
  }
  func.func @transform_1(%arg0: i32) -> (i32, i32) {
    %c0_i32 = arith.constant 0 : i32
    %c0_i32_0 = arith.constant 0 : i32
    return %arg0, %c0_i32 : i32, i32
  }
  func.func @transform_2(%arg0: i32) -> (i32, i32) {
    %c0_i32 = arith.constant 0 : i32
    %c0_i32_0 = arith.constant 0 : i32
    %c0_i32_1 = arith.constant 0 : i32
    return %c0_i32, %c0_i32_0 : i32, i32
  }
  func.func @transform_3(%arg0: i32) -> (i32, i32) {
    %c0_i32 = arith.constant 0 : i32
    %c0_i32_0 = arith.constant 0 : i32
    %c0_i32_1 = arith.constant 0 : i32
    return %c0_i32, %c0_i32_0 : i32, i32
  }
  func.func @transform_4(%arg0: i32) -> (i32, i32) {
    %c0_i32 = arith.constant 0 : i32
    %c0_i32_0 = arith.constant 0 : i32
    %c0_i32_1 = arith.constant 0 : i32
    return %c0_i32, %c0_i32_0 : i32, i32
  }
  func.func @transform_5(%arg0: i32) -> (i32, i32) {
    %c0_i32 = arith.constant 0 : i32
    %c0_i32_0 = arith.constant 0 : i32
    %c0_i32_1 = arith.constant 0 : i32
    return %c0_i32, %c0_i32_0 : i32, i32
  }
  func.func @transform_6(%arg0: i32) -> (i32, i32) {
    %c0_i32 = arith.constant 0 : i32
    %c0_i32_0 = arith.constant 0 : i32
    return %arg0, %c0_i32 : i32, i32
  }
}

</mosaic_0001>

<llo_original>
// kernel: cross_attention_forward.1
$region0: #{cross_attention_forward.1}
  #allocation0 [shape = 'u32[]', space=smem, size = 0x4, offset = 0x4, fixed_abs, tag = 'smem constant byte address 0x4 - core index']
  #allocation1 [shape = 'u32[144,128]{1,0:T(1,128)}', space=vmem, size = 0x12000, scoped, tag = 'internal scratch']
  %s0 = inlined_call_operand.vmem [shape: bf16[64,512], index: 0, kind: input, shape index: {}]
  %s1 = inlined_call_operand.vmem [shape: bf16[32,128], index: 1, kind: input, shape index: {}]
  %s2 = inlined_call_operand.vmem [shape: bf16[512,128], index: 2, kind: input, shape index: {}]
  %s3 = inlined_call_operand.vmem [shape: bf16[128,256], index: 3, kind: input, shape index: {}]
  %s4 = inlined_call_operand.vmem [shape: bf16[512,128], index: 4, kind: input, shape index: {}]
  %s5 = inlined_call_operand.vmem [shape: f32[1,128], index: 5, kind: input, shape index: {}]
  %s6 = inlined_call_operand.vmem [shape: f32[16,128], index: 6, kind: output, shape index: {}]
  %s7 = sld [smem:[#allocation0]]
  $region34: #{cross_attention_forward.1} parent=0
    _
  %s9 = ssub.s32 1, %s7
  %s10 = scalar_select 0, %s9, %s7
  // Predicated region
  $region2: #{cross_attention_forward.1} parent=0 // pred_check
    _
  $region3: #{cross_attention_forward.1} parent=0 // pred_check_branch
    %12 = sbr.rel (0) target = $region5
  $region4: #{cross_attention_forward.1} parent=0 // pred_region
    _
  $region5: #{cross_attention_forward.1} parent=0 // pred_fallthru
    _
  // Predicated region
  $region6: #{cross_attention_forward.1} parent=0 // pred_check
    _
  $region7: #{cross_attention_forward.1} parent=0 // pred_check_branch
    %14 = sbr.rel (0) target = $region9
  $region8: #{cross_attention_forward.1} parent=0 // pred_region
    _
  $region9: #{cross_attention_forward.1} parent=0 // pred_fallthru
    _
  // Predicated region
  $region10: #{cross_attention_forward.1} parent=0 // pred_check
    _
  $region11: #{cross_attention_forward.1} parent=0 // pred_check_branch
    %16 = sbr.rel (0) target = $region13
  $region12: #{cross_attention_forward.1} parent=0 // pred_region
    _
  $region13: #{cross_attention_forward.1} parent=0 // pred_fallthru
    _
  // Predicated region
  $region14: #{cross_attention_forward.1} parent=0 // pred_check
    _
  $region15: #{cross_attention_forward.1} parent=0 // pred_check_branch
    %18 = sbr.rel (0) target = $region17
  $region16: #{cross_attention_forward.1} parent=0 // pred_region
    _
  $region17: #{cross_attention_forward.1} parent=0 // pred_fallthru
    _
  // Predicated region
  $region18: #{cross_attention_forward.1} parent=0 // pred_check
    _
  $region19: #{cross_attention_forward.1} parent=0 // pred_check_branch
    %20 = sbr.rel (0) target = $region21
  $region20: #{cross_attention_forward.1} parent=0 // pred_region
    _
  $region21: #{cross_attention_forward.1} parent=0 // pred_fallthru
    _
  // Predicated region
  $region22: #{cross_attention_forward.1} parent=0 // pred_check
    _
  $region23: #{cross_attention_forward.1} parent=0 // pred_check_branch
    %22 = sbr.rel (0) target = $region25
  $region24: #{cross_attention_forward.1} parent=0 // pred_region
    _
  $region25: #{cross_attention_forward.1} parent=0 // pred_fallthru
    _
  %v24 = vld [vmem:[%s0] sm:$0xff]
  %v25 = vld [vmem:[%s0 + $0x8] sm:$0xff]
  %v26 = vld [vmem:[%s0 + $0x10] sm:$0xff]
  %v27 = vld [vmem:[%s0 + $0x18] sm:$0xff]
  %v28 = vld [vmem:[%s0 + $0x20] sm:$0xff]
  %v29 = vld [vmem:[%s0 + $0x28] sm:$0xff]
  %v30 = vld [vmem:[%s0 + $0x30] sm:$0xff]
  %v31 = vld [vmem:[%s0 + $0x38] sm:$0xff]
  %v32 = vld [vmem:[%s0 + $0x40] sm:$0xff]
  %v33 = vld [vmem:[%s0 + $0x48] sm:$0xff]
  %v34 = vld [vmem:[%s0 + $0x50] sm:$0xff]
  %v35 = vld [vmem:[%s0 + $0x58] sm:$0xff]
  %v36 = vld [vmem:[%s0 + $0x60] sm:$0xff]
  %v37 = vld [vmem:[%s0 + $0x68] sm:$0xff]
  %v38 = vld [vmem:[%s0 + $0x70] sm:$0xff]
  %v39 = vld [vmem:[%s0 + $0x78] sm:$0xff]
  %v40 = vld [vmem:[%s2] sm:$0xf]
  %v41 = vld [vmem:[%s2 + $0x4] sm:$0xf]
  %v42 = vld [vmem:[%s2 + $0x8] sm:$0xf]
  %v43 = vld [vmem:[%s2 + $0xc] sm:$0xf]
  %v44 = vld [vmem:[%s2 + $0x10] sm:$0xf]
  %v45 = vld [vmem:[%s2 + $0x14] sm:$0xf]
  %v46 = vld [vmem:[%s2 + $0x18] sm:$0xf]
  %v47 = vld [vmem:[%s2 + $0x1c] sm:$0xf]
  %v48 = vld [vmem:[%s2 + $0x20] sm:$0xf]
  %v49 = vld [vmem:[%s2 + $0x24] sm:$0xf]
  %v50 = vld [vmem:[%s2 + $0x28] sm:$0xf]
  %v51 = vld [vmem:[%s2 + $0x2c] sm:$0xf]
  %v52 = vld [vmem:[%s2 + $0x30] sm:$0xf]
  %v53 = vld [vmem:[%s2 + $0x34] sm:$0xf]
  %v54 = vld [vmem:[%s2 + $0x38] sm:$0xf]
  %v55 = vld [vmem:[%s2 + $0x3c] sm:$0xf]
  %v56 = vld [vmem:[%s2 + $0x40] sm:$0xf]
  %v57 = vld [vmem:[%s2 + $0x44] sm:$0xf]
  %v58 = vld [vmem:[%s2 + $0x48] sm:$0xf]
  %v59 = vld [vmem:[%s2 + $0x4c] sm:$0xf]
  %v60 = vld [vmem:[%s2 + $0x50] sm:$0xf]
  %v61 = vld [vmem:[%s2 + $0x54] sm:$0xf]
  %v62 = vld [vmem:[%s2 + $0x58] sm:$0xf]
  %v63 = vld [vmem:[%s2 + $0x5c] sm:$0xf]
  %v64 = vld [vmem:[%s2 + $0x60] sm:$0xf]
  %v65 = vld [vmem:[%s2 + $0x64] sm:$0xf]
  %v66 = vld [vmem:[%s2 + $0x68] sm:$0xf]
  %v67 = vld [vmem:[%s2 + $0x6c] sm:$0xf]
  %v68 = vld [vmem:[%s2 + $0x70] sm:$0xf]
  %v69 = vld [vmem:[%s2 + $0x74] sm:$0xf]
  %v70 = vld [vmem:[%s2 + $0x78] sm:$0xf]
  %v71 = vld [vmem:[%s2 + $0x7c] sm:$0xf]
  %v72 = vld [vmem:[%s2 + $0x80] sm:$0xf]
  %v73 = vld [vmem:[%s2 + $0x84] sm:$0xf]
  %v74 = vld [vmem:[%s2 + $0x88] sm:$0xf]
  %v75 = vld [vmem:[%s2 + $0x8c] sm:$0xf]
  %v76 = vld [vmem:[%s2 + $0x90] sm:$0xf]
  %v77 = vld [vmem:[%s2 + $0x94] sm:$0xf]
  %v78 = vld [vmem:[%s2 + $0x98] sm:$0xf]
  %v79 = vld [vmem:[%s2 + $0x9c] sm:$0xf]
  %v80 = vld [vmem:[%s2 + $0xa0] sm:$0xf]
  %v81 = vld [vmem:[%s2 + $0xa4] sm:$0xf]
  %v82 = vld [vmem:[%s2 + $0xa8] sm:$0xf]
  %v83 = vld [vmem:[%s2 + $0xac] sm:$0xf]
  %v84 = vld [vmem:[%s2 + $0xb0] sm:$0xf]
  %v85 = vld [vmem:[%s2 + $0xb4] sm:$0xf]
  %v86 = vld [vmem:[%s2 + $0xb8] sm:$0xf]
  %v87 = vld [vmem:[%s2 + $0xbc] sm:$0xf]
  %v88 = vld [vmem:[%s2 + $0xc0] sm:$0xf]
  %v89 = vld [vmem:[%s2 + $0xc4] sm:$0xf]
  %v90 = vld [vmem:[%s2 + $0xc8] sm:$0xf]
  %v91 = vld [vmem:[%s2 + $0xcc] sm:$0xf]
  %v92 = vld [vmem:[%s2 + $0xd0] sm:$0xf]
  %v93 = vld [vmem:[%s2 + $0xd4] sm:$0xf]
  %v94 = vld [vmem:[%s2 + $0xd8] sm:$0xf]
  %v95 = vld [vmem:[%s2 + $0xdc] sm:$0xf]
  %v96 = vld [vmem:[%s2 + $0xe0] sm:$0xf]
  %v97 = vld [vmem:[%s2 + $0xe4] sm:$0xf]
  %v98 = vld [vmem:[%s2 + $0xe8] sm:$0xf]
  %v99 = vld [vmem:[%s2 + $0xec] sm:$0xf]
  %v100 = vld [vmem:[%s2 + $0xf0] sm:$0xf]
  %v101 = vld [vmem:[%s2 + $0xf4] sm:$0xf]
  %v102 = vld [vmem:[%s2 + $0xf8] sm:$0xf]
  %v103 = vld [vmem:[%s2 + $0xfc] sm:$0xf]
  %v120 = vunpack.c.l.b16 %v24
  %v121 = vunpack.c.h.b16 %v24
  %v122 = vunpack.c.l.b16 %v25
  %v123 = vunpack.c.h.b16 %v25
  %v124 = vunpack.c.l.b16 %v26
  %v125 = vunpack.c.h.b16 %v26
  %v126 = vunpack.c.l.b16 %v27
  %v127 = vunpack.c.h.b16 %v27
  %v128 = vunpack.c.l.b16 %v28
  %v129 = vunpack.c.h.b16 %v28
  %v130 = vunpack.c.l.b16 %v29
  %v131 = vunpack.c.h.b16 %v29
  %v132 = vunpack.c.l.b16 %v30
  %v133 = vunpack.c.h.b16 %v30
  %v134 = vunpack.c.l.b16 %v31
  %v135 = vunpack.c.h.b16 %v31
  %v136 = vunpack.c.l.b16 %v32
  %v137 = vunpack.c.h.b16 %v32
  %v138 = vunpack.c.l.b16 %v33
  %v139 = vunpack.c.h.b16 %v33
  %v140 = vunpack.c.l.b16 %v34
  %v141 = vunpack.c.h.b16 %v34
  %v142 = vunpack.c.l.b16 %v35
  %v143 = vunpack.c.h.b16 %v35
  %v144 = vunpack.c.l.b16 %v36
  %v145 = vunpack.c.h.b16 %v36
  %v146 = vunpack.c.l.b16 %v37
  %v147 = vunpack.c.h.b16 %v37
  %v148 = vunpack.c.l.b16 %v38
  %v149 = vunpack.c.h.b16 %v38
  %v150 = vunpack.c.l.b16 %v39
  %v151 = vunpack.c.h.b16 %v39
  %v152 = vpack.c.b16 %v124, %v120
  %v153 = vpack.c.b16 %v125, %v121
  %v154 = vpack.c.b16 %v126, %v122
  %v155 = vpack.c.b16 %v127, %v123
  %v156 = vpack.c.b16 %v132, %v128
  %v157 = vpack.c.b16 %v133, %v129
  %v158 = vpack.c.b16 %v134, %v130
  %v159 = vpack.c.b16 %v135, %v131
  %v160 = vpack.c.b16 %v140, %v136
  %v161 = vpack.c.b16 %v141, %v137
  %v162 = vpack.c.b16 %v142, %v138
  %v163 = vpack.c.b16 %v143, %v139
  %v164 = vpack.c.b16 %v148, %v144
  %v165 = vpack.c.b16 %v149, %v145
  %v166 = vpack.c.b16 %v150, %v146
  %v167 = vpack.c.b16 %v151, %v147
  %v248 = vunpack.c.l.b16 %v40
  %v249 = vunpack.c.l.b16 %v41
  %v250 = vunpack.c.l.b16 %v42
  %v251 = vunpack.c.l.b16 %v43
  %v252 = vunpack.c.l.b16 %v44
  %v253 = vunpack.c.l.b16 %v45
  %v254 = vunpack.c.l.b16 %v46
  %v255 = vunpack.c.l.b16 %v47
  %v256 = vunpack.c.l.b16 %v48
  %v257 = vunpack.c.l.b16 %v49
  %v258 = vunpack.c.l.b16 %v50
  %v259 = vunpack.c.l.b16 %v51
  %v260 = vunpack.c.l.b16 %v52
  %v261 = vunpack.c.l.b16 %v53
  %v262 = vunpack.c.l.b16 %v54
  %v263 = vunpack.c.l.b16 %v55
  %v264 = vunpack.c.l.b16 %v56
  %v265 = vunpack.c.l.b16 %v57
  %v266 = vunpack.c.l.b16 %v58
  %v267 = vunpack.c.l.b16 %v59
  %v268 = vunpack.c.l.b16 %v60
  %v269 = vunpack.c.l.b16 %v61
  %v270 = vunpack.c.l.b16 %v62
  %v271 = vunpack.c.l.b16 %v63
  %v272 = vunpack.c.l.b16 %v64
  %v273 = vunpack.c.l.b16 %v65
  %v274 = vunpack.c.l.b16 %v66
  %v275 = vunpack.c.l.b16 %v67
  %v276 = vunpack.c.l.b16 %v68
  %v277 = vunpack.c.l.b16 %v69
  %v278 = vunpack.c.l.b16 %v70
  %v279 = vunpack.c.l.b16 %v71
  %v280 = vunpack.c.l.b16 %v72
  %v281 = vunpack.c.l.b16 %v73
  %v282 = vunpack.c.l.b16 %v74
  %v283 = vunpack.c.l.b16 %v75
  %v284 = vunpack.c.l.b16 %v76
  %v285 = vunpack.c.l.b16 %v77
  %v286 = vunpack.c.l.b16 %v78
  %v287 = vunpack.c.l.b16 %v79
  %v288 = vunpack.c.l.b16 %v80
  %v289 = vunpack.c.l.b16 %v81
  %v290 = vunpack.c.l.b16 %v82
  %v291 = vunpack.c.l.b16 %v83
  %v292 = vunpack.c.l.b16 %v84
  %v293 = vunpack.c.l.b16 %v85
  %v294 = vunpack.c.l.b16 %v86
  %v295 = vunpack.c.l.b16 %v87
  %v296 = vunpack.c.l.b16 %v88
  %v297 = vunpack.c.l.b16 %v89
  %v298 = vunpack.c.l.b16 %v90
  %v299 = vunpack.c.l.b16 %v91
  %v300 = vunpack.c.l.b16 %v92
  %v301 = vunpack.c.l.b16 %v93
  %v302 = vunpack.c.l.b16 %v94
  %v303 = vunpack.c.l.b16 %v95
  %v304 = vunpack.c.l.b16 %v96
  %v305 = vunpack.c.l.b16 %v97
  %v306 = vunpack.c.l.b16 %v98
  %v307 = vunpack.c.l.b16 %v99
  %v308 = vunpack.c.l.b16 %v100
  %v309 = vunpack.c.l.b16 %v101
  %v310 = vunpack.c.l.b16 %v102
  %v311 = vunpack.c.l.b16 %v103
  %v312 = vpack.c.b16 %v249, %v248
  %v313 = vpack.c.b16 %v251, %v250
  %v314 = vpack.c.b16 %v253, %v252
  %v315 = vpack.c.b16 %v255, %v254
  %v316 = vpack.c.b16 %v257, %v256
  %v317 = vpack.c.b16 %v259, %v258
  %v318 = vpack.c.b16 %v261, %v260
  %v319 = vpack.c.b16 %v263, %v262
  %v320 = vpack.c.b16 %v265, %v264
  %v321 = vpack.c.b16 %v267, %v266
  %v322 = vpack.c.b16 %v269, %v268
  %v323 = vpack.c.b16 %v271, %v270
  %v324 = vpack.c.b16 %v273, %v272
  %v325 = vpack.c.b16 %v275, %v274
  %v326 = vpack.c.b16 %v277, %v276
  %v327 = vpack.c.b16 %v279, %v278
  %v328 = vpack.c.b16 %v281, %v280
  %v329 = vpack.c.b16 %v283, %v282
  %v330 = vpack.c.b16 %v285, %v284
  %v331 = vpack.c.b16 %v287, %v286
  %v332 = vpack.c.b16 %v289, %v288
  %v333 = vpack.c.b16 %v291, %v290
  %v334 = vpack.c.b16 %v293, %v292
  %v335 = vpack.c.b16 %v295, %v294
  %v336 = vpack.c.b16 %v297, %v296
  %v337 = vpack.c.b16 %v299, %v298
  %v338 = vpack.c.b16 %v301, %v300
  %v339 = vpack.c.b16 %v303, %v302
  %v340 = vpack.c.b16 %v305, %v304
  %v341 = vpack.c.b16 %v307, %v306
  %v342 = vpack.c.b16 %v309, %v308
  %v343 = vpack.c.b16 %v311, %v310
  %376 = vmatprep.subr.bf16.mxu0 0
  %377 = vmatpush1.bf16.msra.mxu0 %v312
  %378 = vmatprep.subr.bf16.mxu0 0
  %379 = vmatpush1.bf16.msra.mxu0 %v313
  %380 = vmatprep.subr.bf16.mxu0 0
  %381 = vmatpush1.bf16.msra.mxu0 %v314
  %382 = vmatprep.subr.bf16.mxu0 0
  %383 = vmatpush1.bf16.msra.mxu0 %v315
  %384 = vmatprep.subr.bf16.mxu0 0
  %385 = vmatpush1.bf16.msra.mxu0 %v316
  %386 = vmatprep.subr.bf16.mxu0 0
  %387 = vmatpush1.bf16.msra.mxu0 %v317
  %388 = vmatprep.subr.bf16.mxu0 0
  %389 = vmatpush1.bf16.msra.mxu0 %v318
  %390 = vmatprep.subr.bf16.mxu0 0
  %391 = vmatpush1.bf16.msra.mxu0 %v319
  %392 = vmatprep.subr.bf16.mxu0 0
  %393 = vmatpush1.bf16.msra.mxu0 %v320
  %394 = vmatprep.subr.bf16.mxu0 0
  %395 = vmatpush1.bf16.msra.mxu0 %v321
  %396 = vmatprep.subr.bf16.mxu0 0
  %397 = vmatpush1.bf16.msra.mxu0 %v322
  %398 = vmatprep.subr.bf16.mxu0 0
  %399 = vmatpush1.bf16.msra.mxu0 %v323
  %400 = vmatprep.subr.bf16.mxu0 0
  %401 = vmatpush1.bf16.msra.mxu0 %v324
  %402 = vmatprep.subr.bf16.mxu0 0
  %403 = vmatpush1.bf16.msra.mxu0 %v325
  %404 = vmatprep.subr.bf16.mxu0 0
  %405 = vmatpush1.bf16.msra.mxu0 %v326
  %406 = vmatprep.subr.bf16.mxu0 0
  %407 = vmatpush1.bf16.msra.mxu0 %v327
  %408 = vmatprep.mubr.bf16.mxu0 %v153
  %409 = vmatmul.mubr.bf16.gmra.mrb[0].mxu0 %v152
  %v410 = vpop.f32.mrb[0].mxu0
  %v411 = vadd.f32 0.0, %v410
  %v412 = vpop.f32.mrb[0].mxu0
  %v413 = vpop.f32.mrb[0].mxu0
  %v414 = vadd.f32 0.0, %v413
  %v415 = vpop.f32.mrb[0].mxu0
  %416 = vmatprep.mubr.bf16.mxu0 %v157
  %417 = vmatmul.mubr.bf16.gmra.mrb[0].mxu0 %v156
  %v418 = vpop.f32.mrb[0].mxu0
  %v419 = vadd.f32 0.0, %v418
  %v420 = vpop.f32.mrb[0].mxu0
  %v421 = vpop.f32.mrb[0].mxu0
  %v422 = vadd.f32 0.0, %v421
  %v423 = vpop.f32.mrb[0].mxu0
  %424 = vmatprep.mubr.bf16.mxu0 %v161
  %425 = vmatmul.mubr.bf16.gmra.mrb[0].mxu0 %v160
  %v426 = vpop.f32.mrb[0].mxu0
  %v427 = vadd.f32 0.0, %v426
  %v428 = vpop.f32.mrb[0].mxu0
  %v429 = vpop.f32.mrb[0].mxu0
  %v430 = vadd.f32 0.0, %v429
  %v431 = vpop.f32.mrb[0].mxu0
  %432 = vmatprep.mubr.bf16.mxu0 %v165
  %433 = vmatmul.mubr.bf16.gmra.mrb[0].mxu0 %v164
  %v434 = vpop.f32.mrb[0].mxu0
  %v435 = vadd.f32 0.0, %v434
  %v436 = vpop.f32.mrb[0].mxu0
  %v437 = vpop.f32.mrb[0].mxu0
  %v438 = vadd.f32 0.0, %v437
  %v439 = vpop.f32.mrb[0].mxu0
  %440 = vdwg.mxu0
  %441 = vmatprep.subr.bf16.mxu0 0
  %442 = vmatpush1.bf16.msra.mxu0 %v328
  %443 = vmatprep.subr.bf16.mxu0 0
  %444 = vmatpush1.bf16.msra.mxu0 %v329
  %445 = vmatprep.subr.bf16.mxu0 0
  %446 = vmatpush1.bf16.msra.mxu0 %v330
  %447 = vmatprep.subr.bf16.mxu0 0
  %448 = vmatpush1.bf16.msra.mxu0 %v331
  %449 = vmatprep.subr.bf16.mxu0 0
  %450 = vmatpush1.bf16.msra.mxu0 %v332
  %451 = vmatprep.subr.bf16.mxu0 0
  %452 = vmatpush1.bf16.msra.mxu0 %v333
  %453 = vmatprep.subr.bf16.mxu0 0
  %454 = vmatpush1.bf16.msra.mxu0 %v334
  %455 = vmatprep.subr.bf16.mxu0 0
  %456 = vmatpush1.bf16.msra.mxu0 %v335
  %457 = vmatprep.subr.bf16.mxu0 0
  %458 = vmatpush1.bf16.msra.mxu0 %v336
  %459 = vmatprep.subr.bf16.mxu0 0
  %460 = vmatpush1.bf16.msra.mxu0 %v337
  %461 = vmatprep.subr.bf16.mxu0 0
  %462 = vmatpush1.bf16.msra.mxu0 %v338
  %463 = vmatprep.subr.bf16.mxu0 0
  %464 = vmatpush1.bf16.msra.mxu0 %v339
  %465 = vmatprep.subr.bf16.mxu0 0
  %466 = vmatpush1.bf16.msra.mxu0 %v340
  %467 = vmatprep.subr.bf16.mxu0 0
  %468 = vmatpush1.bf16.msra.mxu0 %v341
  %469 = vmatprep.subr.bf16.mxu0 0
  %470 = vmatpush1.bf16.msra.mxu0 %v342
  %471 = vmatprep.subr.bf16.mxu0 0
  %472 = vmatpush1.bf16.msra.mxu0 %v343
  %473 = vmatprep.mubr.bf16.mxu0 %v155
  %474 = vmatmul.mubr.bf16.gmra.mrb[0].mxu0 %v154
  %v475 = vpop.f32.mrb[0].mxu0
  %v476 = vadd.f32 %v411, %v475
  %v477 = vpop.f32.mrb[0].mxu0
  %v478 = vpop.f32.mrb[0].mxu0
  %v479 = vadd.f32 %v414, %v478
  %v480 = vpop.f32.mrb[0].mxu0
  %481 = vmatprep.mubr.bf16.mxu0 %v159
  %482 = vmatmul.mubr.bf16.gmra.mrb[0].mxu0 %v158
  %v483 = vpop.f32.mrb[0].mxu0
  %v484 = vadd.f32 %v419, %v483
  %v485 = vpop.f32.mrb[0].mxu0
  %v486 = vpop.f32.mrb[0].mxu0
  %v487 = vadd.f32 %v422, %v486
  %v488 = vpop.f32.mrb[0].mxu0
  %489 = vmatprep.mubr.bf16.mxu0 %v163
  %490 = vmatmul.mubr.bf16.gmra.mrb[0].mxu0 %v162
  %v491 = vpop.f32.mrb[0].mxu0
  %v492 = vadd.f32 %v427, %v491
  %v493 = vpop.f32.mrb[0].mxu0
  %v494 = vpop.f32.mrb[0].mxu0
  %v495 = vadd.f32 %v430, %v494
  %v496 = vpop.f32.mrb[0].mxu0
  %497 = vmatprep.mubr.bf16.mxu0 %v167
  %498 = vmatmul.mubr.bf16.gmra.mrb[0].mxu0 %v166
  %v499 = vpop.f32.mrb[0].mxu0
  %v500 = vadd.f32 %v435, %v499
  %v501 = vpop.f32.mrb[0].mxu0
  %v502 = vpop.f32.mrb[0].mxu0
  %v503 = vadd.f32 %v438, %v502
  %v504 = vpop.f32.mrb[0].mxu0
  %505 = vdwg.mxu0
  %v506 = vld [vmem:[%s1] sm:$0xf]
  %v507 = vld [vmem:[%s1 + $0x4] sm:$0xf]
  %v508 = vld [vmem:[%s1 + $0x8] sm:$0xf]
  %v509 = vld [vmem:[%s1 + $0xc] sm:$0xf]
  %v510 = vld [vmem:[%s3] sm:$0xff]
  %v511 = vld [vmem:[%s3 + $0x8] sm:$0xff]
  %v512 = vld [vmem:[%s3 + $0x10] sm:$0xff]
  %v513 = vld [vmem:[%s3 + $0x18] sm:$0xff]
  %v514 = vld [vmem:[%s3 + $0x20] sm:$0xff]
  %v515 = vld [vmem:[%s3 + $0x28] sm:$0xff]
  %v516 = vld [vmem:[%s3 + $0x30] sm:$0xff]
  %v517 = vld [vmem:[%s3 + $0x38] sm:$0xff]
  %v518 = vld [vmem:[%s3 + $0x40] sm:$0xff]
  %v519 = vld [vmem:[%s3 + $0x48] sm:$0xff]
  %v520 = vld [vmem:[%s3 + $0x50] sm:$0xff]
  %v521 = vld [vmem:[%s3 + $0x58] sm:$0xff]
  %v522 = vld [vmem:[%s3 + $0x60] sm:$0xff]
  %v523 = vld [vmem:[%s3 + $0x68] sm:$0xff]
  %v524 = vld [vmem:[%s3 + $0x70] sm:$0xff]
  %v525 = vld [vmem:[%s3 + $0x78] sm:$0xff]
  %v530 = vunpack.c.l.b16 %v506
  %v531 = vunpack.c.l.b16 %v507
  %v532 = vunpack.c.l.b16 %v508
  %v533 = vunpack.c.l.b16 %v509
  %v534 = vpack.c.b16 %v531, %v530
  %v535 = vpack.c.b16 %v533, %v532
  %v554 = vunpack.c.l.b16 %v510
  %v555 = vunpack.c.h.b16 %v510
  %v556 = vunpack.c.l.b16 %v511
  %v557 = vunpack.c.h.b16 %v511
  %v558 = vunpack.c.l.b16 %v512
  %v559 = vunpack.c.h.b16 %v512
  %v560 = vunpack.c.l.b16 %v513
  %v561 = vunpack.c.h.b16 %v513
  %v562 = vunpack.c.l.b16 %v514
  %v563 = vunpack.c.h.b16 %v514
  %v564 = vunpack.c.l.b16 %v515
  %v565 = vunpack.c.h.b16 %v515
  %v566 = vunpack.c.l.b16 %v516
  %v567 = vunpack.c.h.b16 %v516
  %v568 = vunpack.c.l.b16 %v517
  %v569 = vunpack.c.h.b16 %v517
  %v570 = vunpack.c.l.b16 %v518
  %v571 = vunpack.c.h.b16 %v518
  %v572 = vunpack.c.l.b16 %v519
  %v573 = vunpack.c.h.b16 %v519
  %v574 = vunpack.c.l.b16 %v520
  %v575 = vunpack.c.h.b16 %v520
  %v576 = vunpack.c.l.b16 %v521
  %v577 = vunpack.c.h.b16 %v521
  %v578 = vunpack.c.l.b16 %v522
  %v579 = vunpack.c.h.b16 %v522
  %v580 = vunpack.c.l.b16 %v523
  %v581 = vunpack.c.h.b16 %v523
  %v582 = vunpack.c.l.b16 %v524
  %v583 = vunpack.c.h.b16 %v524
  %v584 = vunpack.c.l.b16 %v525
  %v585 = vunpack.c.h.b16 %v525
  %v586 = vpack.c.b16 %v556, %v554
  %v587 = vpack.c.b16 %v557, %v555
  %v588 = vpack.c.b16 %v560, %v558
  %v589 = vpack.c.b16 %v561, %v559
  %v590 = vpack.c.b16 %v564, %v562
  %v591 = vpack.c.b16 %v565, %v563
  %v592 = vpack.c.b16 %v568, %v566
  %v593 = vpack.c.b16 %v569, %v567
  %v594 = vpack.c.b16 %v572, %v570
  %v595 = vpack.c.b16 %v573, %v571
  %v596 = vpack.c.b16 %v576, %v574
  %v597 = vpack.c.b16 %v577, %v575
  %v598 = vpack.c.b16 %v580, %v578
  %v599 = vpack.c.b16 %v581, %v579
  %v600 = vpack.c.b16 %v584, %v582
  %v601 = vpack.c.b16 %v585, %v583
  %618 = vmatprep.subr.bf16.mxu0 %v587
  %619 = vmatpush1.bf16.msra.mxu0 %v586
  %620 = vmatprep.subr.bf16.mxu0 %v589
  %621 = vmatpush1.bf16.msra.mxu0 %v588
  %622 = vmatprep.subr.bf16.mxu0 %v591
  %623 = vmatpush1.bf16.msra.mxu0 %v590
  %624 = vmatprep.subr.bf16.mxu0 %v593
  %625 = vmatpush1.bf16.msra.mxu0 %v592
  %626 = vmatprep.subr.bf16.mxu0 %v595
  %627 = vmatpush1.bf16.msra.mxu0 %v594
  %628 = vmatprep.subr.bf16.mxu0 %v597
  %629 = vmatpush1.bf16.msra.mxu0 %v596
  %630 = vmatprep.subr.bf16.mxu0 %v599
  %631 = vmatpush1.bf16.msra.mxu0 %v598
  %632 = vmatprep.subr.bf16.mxu0 %v601
  %633 = vmatpush1.bf16.msra.mxu0 %v600
  %634 = vmatprep.subr.bf16.mxu0 0
  %635 = vmatpush1.bf16.msra.mxu0 0
  %636 = vmatprep.subr.bf16.mxu0 0
  %637 = vmatpush1.bf16.msra.mxu0 0
  %638 = vmatprep.subr.bf16.mxu0 0
  %639 = vmatpush1.bf16.msra.mxu0 0
  %640 = vmatprep.subr.bf16.mxu0 0
  %641 = vmatpush1.bf16.msra.mxu0 0
  %642 = vmatprep.subr.bf16.mxu0 0
  %643 = vmatpush1.bf16.msra.mxu0 0
  %644 = vmatprep.subr.bf16.mxu0 0
  %645 = vmatpush1.bf16.msra.mxu0 0
  %646 = vmatprep.subr.bf16.mxu0 0
  %647 = vmatpush1.bf16.msra.mxu0 0
  %648 = vmatprep.subr.bf16.mxu0 0
  %649 = vmatpush1.bf16.msra.mxu0 0
  %650 = vmatprep.mubr.bf16.mxu0 0
  %651 = vmatmul.mubr.bf16.gmra.mrb[0].mxu0 %v534
  %v652 = vpop.f32.mrb[0].mxu0
  %v653 = vadd.f32 0.0, %v652
  %v654 = vpop.f32.mrb[0].mxu0
  %v655 = vadd.f32 0.0, %v654
  %v656 = vpop.f32.mrb[0].mxu0
  %v657 = vadd.f32 0.0, %v656
  %v658 = vpop.f32.mrb[0].mxu0
  %v659 = vadd.f32 0.0, %v658
  %660 = vmatprep.mubr.bf16.mxu0 0
  %661 = vmatmul.mubr.bf16.gmra.mrb[0].mxu0 %v535
  %v662 = vpop.f32.mrb[0].mxu0
  %v663 = vadd.f32 0.0, %v662
  %v664 = vpop.f32.mrb[0].mxu0
  %v665 = vadd.f32 0.0, %v664
  %v666 = vpop.f32.mrb[0].mxu0
  %v667 = vadd.f32 0.0, %v666
  %v668 = vpop.f32.mrb[0].mxu0
  %v669 = vadd.f32 0.0, %v668
  %670 = vdwg.mxu0
  %v671 = vpack.c.bf16 %v479, %v476
  %v672 = vpack.c.bf16 %v487, %v484
  %v673 = vpack.c.bf16 %v657, %v653
  %v674 = vpack.c.bf16 %v659, %v655
  %675 = vmatprep.subr.bf16.mxu0 0
  %676 = vmatpush1.bf16.xpose.msra.mxu0 %v673
  %677 = vmatprep.subr.bf16.mxu0 0
  %678 = vmatpush1.bf16.xpose.msra.mxu0 0
  %679 = vmatprep.subr.bf16.mxu0 0
  %680 = vmatpush1.bf16.xpose.msra.mxu0 0
  %681 = vmatprep.subr.bf16.mxu0 0
  %682 = vmatpush1.bf16.xpose.msra.mxu0 0
  %683 = vmatprep.subr.bf16.mxu0 0
  %684 = vmatpush1.bf16.xpose.msra.mxu0 0
  %685 = vmatprep.subr.bf16.mxu0 0
  %686 = vmatpush1.bf16.xpose.msra.mxu0 0
  %687 = vmatprep.subr.bf16.mxu0 0
  %688 = vmatpush1.bf16.xpose.msra.mxu0 0
  %689 = vmatprep.subr.bf16.mxu0 0
  %690 = vmatpush1.bf16.xpose.msra.mxu0 0
  %691 = vmatprep.subr.bf16.mxu0 0
  %692 = vmatpush1.bf16.xpose.msra.mxu0 0
  %693 = vmatprep.subr.bf16.mxu0 0
  %694 = vmatpush1.bf16.xpose.msra.mxu0 0
  %695 = vmatprep.subr.bf16.mxu0 0
  %696 = vmatpush1.bf16.xpose.msra.mxu0 0
  %697 = vmatprep.subr.bf16.mxu0 0
  %698 = vmatpush1.bf16.xpose.msra.mxu0 0
  %699 = vmatprep.subr.bf16.mxu0 0
  %700 = vmatpush1.bf16.xpose.msra.mxu0 0
  %701 = vmatprep.subr.bf16.mxu0 0
  %702 = vmatpush1.bf16.xpose.msra.mxu0 0
  %703 = vmatprep.subr.bf16.mxu0 0
  %704 = vmatpush1.bf16.xpose.msra.mxu0 0
  %705 = vmatprep.subr.bf16.mxu0 0
  %706 = vmatpush1.bf16.xpose.msra.mxu0 0
  %707 = vmatprep.mubr.bf16.mxu0 0
  %708 = vmatmul.mubr.bf16.gmra.mrb[0].mxu0 %v671
  %v709 = vpop.f32.mrb[0].mxu0
  %v710 = vadd.f32 0.0, %v709
  %v711 = vpop.f32.mrb[0].mxu0
  %v712 = vpop.f32.mrb[0].mxu0
  %v713 = vadd.f32 0.0, %v712
  %v714 = vpop.f32.mrb[0].mxu0
  %715 = vmatprep.mubr.bf16.mxu0 0
  %716 = vmatmul.mubr.bf16.gmra.mrb[0].mxu0 %v672
  %v717 = vpop.f32.mrb[0].mxu0
  %v718 = vadd.f32 0.0, %v717
  %v719 = vpop.f32.mrb[0].mxu0
  %v720 = vpop.f32.mrb[0].mxu0
  %v721 = vadd.f32 0.0, %v720
  %v722 = vpop.f32.mrb[0].mxu0
  %723 = vdwg.mxu0
  %vm724 = vcmask 130048
  %v725 = vsel %vm724, %v710, -inf
  %726 = vmax.xlane.f32.xlu0 %v725
  %v727 = vpop.xlane.xlu0 %726
  %v728 = vsel %vm724, %v713, -inf
  %729 = vmax.xlane.f32.xlu0 %v728
  %v730 = vpop.xlane.xlu0 %729
  %v731 = vsel %vm724, %v718, -inf
  %732 = vmax.xlane.f32.xlu0 %v731
  %v733 = vpop.xlane.xlu0 %732
  %v734 = vsel %vm724, %v721, -inf
  %735 = vmax.xlane.f32.xlu0 %v734
  %v736 = vpop.xlane.xlu0 %735
  %v737 = vsub.f32 %v710, %v727
  %v738 = vsub.f32 %v713, %v730
  %v739 = vsub.f32 %v718, %v733
  %v740 = vsub.f32 %v721, %v736
  %v741 = vmul.f32 %v737, 1.442695
  %v742 = vpow.pop %v741
  %v743 = vmul.f32 %v738, 1.442695
  %v744 = vpow.pop %v743
  %v745 = vmul.f32 %v739, 1.442695
  %v746 = vpow.pop %v745
  %v747 = vmul.f32 %v740, 1.442695
  %v748 = vpow.pop %v747
  %v749 = vsel %vm724, %v742, 0.0
  %750 = vadd.xlane.f32.xlu0 %v749
  %v751 = vpop.xlane.xlu0 %750
  %v752 = vsel %vm724, %v744, 0.0
  %753 = vadd.xlane.f32.xlu0 %v752
  %v754 = vpop.xlane.xlu0 %753
  %v755 = vsel %vm724, %v746, 0.0
  %756 = vadd.xlane.f32.xlu0 %v755
  %v757 = vpop.xlane.xlu0 %756
  %v758 = vsel %vm724, %v748, 0.0
  %759 = vadd.xlane.f32.xlu0 %v758
  %v760 = vpop.xlane.xlu0 %759
  %v761 = vpack.c.bf16 %v744, %v742
  %v762 = vpack.c.bf16 %v748, %v746
  %v764 = vsel %vm724, %v761, 0
  %v767 = vsel %vm724, %v762, 0
  %769 = vmatprep.subr.bf16.mxu0 0
  %770 = vmatpush1.bf16.msra.mxu0 %v674
  %771 = vmatprep.subr.bf16.mxu0 0
  %772 = vmatpush1.bf16.msra.mxu0 0
  %773 = vmatprep.subr.bf16.mxu0 0
  %774 = vmatpush1.bf16.msra.mxu0 0
  %775 = vmatprep.subr.bf16.mxu0 0
  %776 = vmatpush1.bf16.msra.mxu0 0
  %777 = vmatprep.subr.bf16.mxu0 0
  %778 = vmatpush1.bf16.msra.mxu0 0
  %779 = vmatprep.subr.bf16.mxu0 0
  %780 = vmatpush1.bf16.msra.mxu0 0
  %781 = vmatprep.subr.bf16.mxu0 0
  %782 = vmatpush1.bf16.msra.mxu0 0
  %783 = vmatprep.subr.bf16.mxu0 0
  %784 = vmatpush1.bf16.msra.mxu0 0
  %785 = vmatprep.subr.bf16.mxu0 0
  %786 = vmatpush1.bf16.msra.mxu0 0
  %787 = vmatprep.subr.bf16.mxu0 0
  %788 = vmatpush1.bf16.msra.mxu0 0
  %789 = vmatprep.subr.bf16.mxu0 0
  %790 = vmatpush1.bf16.msra.mxu0 0
  %791 = vmatprep.subr.bf16.mxu0 0
  %792 = vmatpush1.bf16.msra.mxu0 0
  %793 = vmatprep.subr.bf16.mxu0 0
  %794 = vmatpush1.bf16.msra.mxu0 0
  %795 = vmatprep.subr.bf16.mxu0 0
  %796 = vmatpush1.bf16.msra.mxu0 0
  %797 = vmatprep.subr.bf16.mxu0 0
  %798 = vmatpush1.bf16.msra.mxu0 0
  %799 = vmatprep.subr.bf16.mxu0 0
  %800 = vmatpush1.bf16.msra.mxu0 0
  %801 = vmatprep.mubr.bf16.mxu0 0
  %802 = vmatmul.mubr.bf16.gmra.mrb[0].mxu0 %v764
  %v803 = vpop.f32.mrb[0].mxu0
  %v804 = vadd.f32 0.0, %v803
  %v805 = vpop.f32.mrb[0].mxu0
  %v806 = vpop.f32.mrb[0].mxu0
  %v807 = vadd.f32 0.0, %v806
  %v808 = vpop.f32.mrb[0].mxu0
  %809 = vmatprep.mubr.bf16.mxu0 0
  %810 = vmatmul.mubr.bf16.gmra.mrb[0].mxu0 %v767
  %v811 = vpop.f32.mrb[0].mxu0
  %v812 = vadd.f32 0.0, %v811
  %v813 = vpop.f32.mrb[0].mxu0
  %v814 = vpop.f32.mrb[0].mxu0
  %v815 = vadd.f32 0.0, %v814
  %v816 = vpop.f32.mrb[0].mxu0
  %817 = vdwg.mxu0
  %v818 = vpack.c.bf16 %v495, %v492
  %v819 = vpack.c.bf16 %v503, %v500
  %v820 = vpack.c.bf16 %v667, %v663
  %v821 = vpack.c.bf16 %v669, %v665
  %822 = vmatprep.subr.bf16.mxu0 0
  %823 = vmatpush1.bf16.xpose.msra.mxu0 %v820
  %824 = vmatprep.subr.bf16.mxu0 0
  %825 = vmatpush1.bf16.xpose.msra.mxu0 0
  %826 = vmatprep.subr.bf16.mxu0 0
  %827 = vmatpush1.bf16.xpose.msra.mxu0 0
  %828 = vmatprep.subr.bf16.mxu0 0
  %829 = vmatpush1.bf16.xpose.msra.mxu0 0
  %830 = vmatprep.subr.bf16.mxu0 0
  %831 = vmatpush1.bf16.xpose.msra.mxu0 0
  %832 = vmatprep.subr.bf16.mxu0 0
  %833 = vmatpush1.bf16.xpose.msra.mxu0 0
  %834 = vmatprep.subr.bf16.mxu0 0
  %835 = vmatpush1.bf16.xpose.msra.mxu0 0
  %836 = vmatprep.subr.bf16.mxu0 0
  %837 = vmatpush1.bf16.xpose.msra.mxu0 0
  %838 = vmatprep.subr.bf16.mxu0 0
  %839 = vmatpush1.bf16.xpose.msra.mxu0 0
  %840 = vmatprep.subr.bf16.mxu0 0
  %841 = vmatpush1.bf16.xpose.msra.mxu0 0
  %842 = vmatprep.subr.bf16.mxu0 0
  %843 = vmatpush1.bf16.xpose.msra.mxu0 0
  %844 = vmatprep.subr.bf16.mxu0 0
  %845 = vmatpush1.bf16.xpose.msra.mxu0 0
  %846 = vmatprep.subr.bf16.mxu0 0
  %847 = vmatpush1.bf16.xpose.msra.mxu0 0
  %848 = vmatprep.subr.bf16.mxu0 0
  %849 = vmatpush1.bf16.xpose.msra.mxu0 0
  %850 = vmatprep.subr.bf16.mxu0 0
  %851 = vmatpush1.bf16.xpose.msra.mxu0 0
  %852 = vmatprep.subr.bf16.mxu0 0
  %853 = vmatpush1.bf16.xpose.msra.mxu0 0
  %854 = vmatprep.mubr.bf16.mxu0 0
  %855 = vmatmul.mubr.bf16.gmra.mrb[0].mxu0 %v818
  %v856 = vpop.f32.mrb[0].mxu0
  %v857 = vadd.f32 0.0, %v856
  %v858 = vpop.f32.mrb[0].mxu0
  %v859 = vpop.f32.mrb[0].mxu0
  %v860 = vadd.f32 0.0, %v859
  %v861 = vpop.f32.mrb[0].mxu0
  %862 = vmatprep.mubr.bf16.mxu0 0
  %863 = vmatmul.mubr.bf16.gmra.mrb[0].mxu0 %v819
  %v864 = vpop.f32.mrb[0].mxu0
  %v865 = vadd.f32 0.0, %v864
  %v866 = vpop.f32.mrb[0].mxu0
  %v867 = vpop.f32.mrb[0].mxu0
  %v868 = vadd.f32 0.0, %v867
  %v869 = vpop.f32.mrb[0].mxu0
  %870 = vdwg.mxu0
  %v871 = vsel %vm724, %v857, -inf
  %872 = vmax.xlane.f32.xlu0 %v871
  %v873 = vpop.xlane.xlu0 %872
  %v874 = vsel %vm724, %v860, -inf
  %875 = vmax.xlane.f32.xlu0 %v874
  %v876 = vpop.xlane.xlu0 %875
  %v877 = vsel %vm724, %v865, -inf
  %878 = vmax.xlane.f32.xlu0 %v877
  %v879 = vpop.xlane.xlu0 %878
  %v880 = vsel %vm724, %v868, -inf
  %881 = vmax.xlane.f32.xlu0 %v880
  %v882 = vpop.xlane.xlu0 %881
  %v883 = vsub.f32 %v857, %v873
  %v884 = vsub.f32 %v860, %v876
  %v885 = vsub.f32 %v865, %v879
  %v886 = vsub.f32 %v868, %v882
  %v887 = vmul.f32 %v883, 1.442695
  %v888 = vpow.pop %v887
  %v889 = vmul.f32 %v884, 1.442695
  %v890 = vpow.pop %v889
  %v891 = vmul.f32 %v885, 1.442695
  %v892 = vpow.pop %v891
  %v893 = vmul.f32 %v886, 1.442695
  %v894 = vpow.pop %v893
  %v895 = vsel %vm724, %v888, 0.0
  %896 = vadd.xlane.f32.xlu0 %v895
  %v897 = vpop.xlane.xlu0 %896
  %v898 = vsel %vm724, %v890, 0.0
  %899 = vadd.xlane.f32.xlu0 %v898
  %v900 = vpop.xlane.xlu0 %899
  %v901 = vsel %vm724, %v892, 0.0
  %902 = vadd.xlane.f32.xlu0 %v901
  %v903 = vpop.xlane.xlu0 %902
  %v904 = vsel %vm724, %v894, 0.0
  %905 = vadd.xlane.f32.xlu0 %v904
  %v906 = vpop.xlane.xlu0 %905
  %v907 = vpack.c.bf16 %v890, %v888
  %v908 = vpack.c.bf16 %v894, %v892
  %v910 = vsel %vm724, %v907, 0
  %v913 = vsel %vm724, %v908, 0
  %915 = vmatprep.subr.bf16.mxu0 0
  %916 = vmatpush1.bf16.msra.mxu0 %v821
  %917 = vmatprep.subr.bf16.mxu0 0
  %918 = vmatpush1.bf16.msra.mxu0 0
  %919 = vmatprep.subr.bf16.mxu0 0
  %920 = vmatpush1.bf16.msra.mxu0 0
  %921 = vmatprep.subr.bf16.mxu0 0
  %922 = vmatpush1.bf16.msra.mxu0 0
  %923 = vmatprep.subr.bf16.mxu0 0
  %924 = vmatpush1.bf16.msra.mxu0 0
  %925 = vmatprep.subr.bf16.mxu0 0
  %926 = vmatpush1.bf16.msra.mxu0 0
  %927 = vmatprep.subr.bf16.mxu0 0
  %928 = vmatpush1.bf16.msra.mxu0 0
  %929 = vmatprep.subr.bf16.mxu0 0
  %930 = vmatpush1.bf16.msra.mxu0 0
  %931 = vmatprep.subr.bf16.mxu0 0
  %932 = vmatpush1.bf16.msra.mxu0 0
  %933 = vmatprep.subr.bf16.mxu0 0
  %934 = vmatpush1.bf16.msra.mxu0 0
  %935 = vmatprep.subr.bf16.mxu0 0
  %936 = vmatpush1.bf16.msra.mxu0 0
  %937 = vmatprep.subr.bf16.mxu0 0
  %938 = vmatpush1.bf16.msra.mxu0 0
  %939 = vmatprep.subr.bf16.mxu0 0
  %940 = vmatpush1.bf16.msra.mxu0 0
  %941 = vmatprep.subr.bf16.mxu0 0
  %942 = vmatpush1.bf16.msra.mxu0 0
  %943 = vmatprep.subr.bf16.mxu0 0
  %944 = vmatpush1.bf16.msra.mxu0 0
  %945 = vmatprep.subr.bf16.mxu0 0
  %946 = vmatpush1.bf16.msra.mxu0 0
  %947 = vmatprep.mubr.bf16.mxu0 0
  %948 = vmatmul.mubr.bf16.gmra.mrb[0].mxu0 %v910
  %v949 = vpop.f32.mrb[0].mxu0
  %v950 = vadd.f32 0.0, %v949
  %v951 = vpop.f32.mrb[0].mxu0
  %v952 = vpop.f32.mrb[0].mxu0
  %v953 = vadd.f32 0.0, %v952
  %v954 = vpop.f32.mrb[0].mxu0
  %955 = vmatprep.mubr.bf16.mxu0 0
  %956 = vmatmul.mubr.bf16.gmra.mrb[0].mxu0 %v913
  %v957 = vpop.f32.mrb[0].mxu0
  %v958 = vadd.f32 0.0, %v957
  %v959 = vpop.f32.mrb[0].mxu0
  %v960 = vpop.f32.mrb[0].mxu0
  %v961 = vadd.f32 0.0, %v960
  %v962 = vpop.f32.mrb[0].mxu0
  %963 = vdwg.mxu0
  %v964 = vrcp.pop %v751
  %v965 = vrcp.pop %v754
  %v966 = vrcp.pop %v757
  %v967 = vrcp.pop %v760
  %v968 = vrcp.pop %v897
  %v969 = vrcp.pop %v900
  %v970 = vrcp.pop %v903
  %v971 = vrcp.pop %v906
  %973 = vset.pattern.permute.xlu0 0
  %974 = vperm.xlu0 %973, %v964
  %v975 = vpop.permute.xlu0 %974
  %978 = vset.pattern.permute.xlu0 0
  %979 = vperm.xlu0 %978, %v965
  %v980 = vpop.permute.xlu0 %979
  %983 = vset.pattern.permute.xlu0 0
  %984 = vperm.xlu0 %983, %v966
  %v985 = vpop.permute.xlu0 %984
  %988 = vset.pattern.permute.xlu0 0
  %989 = vperm.xlu0 %988, %v967
  %v990 = vpop.permute.xlu0 %989
  %993 = vset.pattern.permute.xlu0 0
  %994 = vperm.xlu0 %993, %v968
  %v995 = vpop.permute.xlu0 %994
  %998 = vset.pattern.permute.xlu0 0
  %999 = vperm.xlu0 %998, %v969
  %v1000 = vpop.permute.xlu0 %999
  %1003 = vset.pattern.permute.xlu0 0
  %1004 = vperm.xlu0 %1003, %v970
  %v1005 = vpop.permute.xlu0 %1004
  %1008 = vset.pattern.permute.xlu0 0
  %1009 = vperm.xlu0 %1008, %v971
  %v1010 = vpop.permute.xlu0 %1009
  %v1012 = vmul.f32 %v804, %v975
  %v1013 = vmul.f32 %v807, %v980
  %v1014 = vmul.f32 %v812, %v985
  %v1015 = vmul.f32 %v815, %v990
  %v1016 = vmul.f32 %v950, %v995
  %v1017 = vmul.f32 %v953, %v1000
  %v1018 = vmul.f32 %v958, %v1005
  %v1019 = vmul.f32 %v961, %v1010
  %v1020 = vpack.c.bf16 %v1016, %v1012
  %v1021 = vpack.c.bf16 %v1017, %v1013
  %v1022 = vpack.c.bf16 %v1018, %v1014
  %v1023 = vpack.c.bf16 %v1019, %v1015
  %v1024 = vld [vmem:[%s4] sm:$0xf]
  %v1025 = vld [vmem:[%s4 + $0x4] sm:$0xf]
  %v1026 = vld [vmem:[%s4 + $0x8] sm:$0xf]
  %v1027 = vld [vmem:[%s4 + $0xc] sm:$0xf]
  %v1028 = vld [vmem:[%s4 + $0x10] sm:$0xf]
  %v1029 = vld [vmem:[%s4 + $0x14] sm:$0xf]
  %v1030 = vld [vmem:[%s4 + $0x18] sm:$0xf]
  %v1031 = vld [vmem:[%s4 + $0x1c] sm:$0xf]
  %v1032 = vld [vmem:[%s4 + $0x20] sm:$0xf]
  %v1033 = vld [vmem:[%s4 + $0x24] sm:$0xf]
  %v1034 = vld [vmem:[%s4 + $0x28] sm:$0xf]
  %v1035 = vld [vmem:[%s4 + $0x2c] sm:$0xf]
  %v1036 = vld [vmem:[%s4 + $0x30] sm:$0xf]
  %v1037 = vld [vmem:[%s4 + $0x34] sm:$0xf]
  %v1038 = vld [vmem:[%s4 + $0x38] sm:$0xf]
  %v1039 = vld [vmem:[%s4 + $0x3c] sm:$0xf]
  %v1040 = vld [vmem:[%s4 + $0x40] sm:$0xf]
  %v1041 = vld [vmem:[%s4 + $0x44] sm:$0xf]
  %v1042 = vld [vmem:[%s4 + $0x48] sm:$0xf]
  %v1043 = vld [vmem:[%s4 + $0x4c] sm:$0xf]
  %v1044 = vld [vmem:[%s4 + $0x50] sm:$0xf]
  %v1045 = vld [vmem:[%s4 + $0x54] sm:$0xf]
  %v1046 = vld [vmem:[%s4 + $0x58] sm:$0xf]
  %v1047 = vld [vmem:[%s4 + $0x5c] sm:$0xf]
  %v1048 = vld [vmem:[%s4 + $0x60] sm:$0xf]
  %v1049 = vld [vmem:[%s4 + $0x64] sm:$0xf]
  %v1050 = vld [vmem:[%s4 + $0x68] sm:$0xf]
  %v1051 = vld [vmem:[%s4 + $0x6c] sm:$0xf]
  %v1052 = vld [vmem:[%s4 + $0x70] sm:$0xf]
  %v1053 = vld [vmem:[%s4 + $0x74] sm:$0xf]
  %v1054 = vld [vmem:[%s4 + $0x78] sm:$0xf]
  %v1055 = vld [vmem:[%s4 + $0x7c] sm:$0xf]
  %v1056 = vld [vmem:[%s4 + $0x80] sm:$0xf]
  %v1057 = vld [vmem:[%s4 + $0x84] sm:$0xf]
  %v1058 = vld [vmem:[%s4 + $0x88] sm:$0xf]
  %v1059 = vld [vmem:[%s4 + $0x8c] sm:$0xf]
  %v1060 = vld [vmem:[%s4 + $0x90] sm:$0xf]
  %v1061 = vld [vmem:[%s4 + $0x94] sm:$0xf]
  %v1062 = vld [vmem:[%s4 + $0x98] sm:$0xf]
  %v1063 = vld [vmem:[%s4 + $0x9c] sm:$0xf]
  %v1064 = vld [vmem:[%s4 + $0xa0] sm:$0xf]
  %v1065 = vld [vmem:[%s4 + $0xa4] sm:$0xf]
  %v1066 = vld [vmem:[%s4 + $0xa8] sm:$0xf]
  %v1067 = vld [vmem:[%s4 + $0xac] sm:$0xf]
  %v1068 = vld [vmem:[%s4 + $0xb0] sm:$0xf]
  %v1069 = vld [vmem:[%s4 + $0xb4] sm:$0xf]
  %v1070 = vld [vmem:[%s4 + $0xb8] sm:$0xf]
  %v1071 = vld [vmem:[%s4 + $0xbc] sm:$0xf]
  %v1072 = vld [vmem:[%s4 + $0xc0] sm:$0xf]
  %v1073 = vld [vmem:[%s4 + $0xc4] sm:$0xf]
  %v1074 = vld [vmem:[%s4 + $0xc8] sm:$0xf]
  %v1075 = vld [vmem:[%s4 + $0xcc] sm:$0xf]
  %v1076 = vld [vmem:[%s4 + $0xd0] sm:$0xf]
  %v1077 = vld [vmem:[%s4 + $0xd4] sm:$0xf]
  %v1078 = vld [vmem:[%s4 + $0xd8] sm:$0xf]
  %v1079 = vld [vmem:[%s4 + $0xdc] sm:$0xf]
  %v1080 = vld [vmem:[%s4 + $0xe0] sm:$0xf]
  %v1081 = vld [vmem:[%s4 + $0xe4] sm:$0xf]
  %v1082 = vld [vmem:[%s4 + $0xe8] sm:$0xf]
  %v1083 = vld [vmem:[%s4 + $0xec] sm:$0xf]
  %v1084 = vld [vmem:[%s4 + $0xf0] sm:$0xf]
  %v1085 = vld [vmem:[%s4 + $0xf4] sm:$0xf]
  %v1086 = vld [vmem:[%s4 + $0xf8] sm:$0xf]
  %v1087 = vld [vmem:[%s4 + $0xfc] sm:$0xf]
  %v1088 = vld [vmem:[%s5] sm:$0x1]
  %v1090 = vlaneseq
  %v1091 = vshrl.u32 %v1090, 7
  %v1092 = vsub.s32 0, %v1091
  %v1093 = vrot.slane %v1088, %v1092
  %v1159 = vunpack.c.l.b16 %v1024
  %v1160 = vunpack.c.l.b16 %v1025
  %v1161 = vunpack.c.l.b16 %v1026
  %v1162 = vunpack.c.l.b16 %v1027
  %v1163 = vunpack.c.l.b16 %v1028
  %v1164 = vunpack.c.l.b16 %v1029
  %v1165 = vunpack.c.l.b16 %v1030
  %v1166 = vunpack.c.l.b16 %v1031
  %v1167 = vunpack.c.l.b16 %v1032
  %v1168 = vunpack.c.l.b16 %v1033
  %v1169 = vunpack.c.l.b16 %v1034
  %v1170 = vunpack.c.l.b16 %v1035
  %v1171 = vunpack.c.l.b16 %v1036
  %v1172 = vunpack.c.l.b16 %v1037
  %v1173 = vunpack.c.l.b16 %v1038
  %v1174 = vunpack.c.l.b16 %v1039
  %v1175 = vunpack.c.l.b16 %v1040
  %v1176 = vunpack.c.l.b16 %v1041
  %v1177 = vunpack.c.l.b16 %v1042
  %v1178 = vunpack.c.l.b16 %v1043
  %v1179 = vunpack.c.l.b16 %v1044
  %v1180 = vunpack.c.l.b16 %v1045
  %v1181 = vunpack.c.l.b16 %v1046
  %v1182 = vunpack.c.l.b16 %v1047
  %v1183 = vunpack.c.l.b16 %v1048
  %v1184 = vunpack.c.l.b16 %v1049
  %v1185 = vunpack.c.l.b16 %v1050
  %v1186 = vunpack.c.l.b16 %v1051
  %v1187 = vunpack.c.l.b16 %v1052
  %v1188 = vunpack.c.l.b16 %v1053
  %v1189 = vunpack.c.l.b16 %v1054
  %v1190 = vunpack.c.l.b16 %v1055
  %v1191 = vunpack.c.l.b16 %v1056
  %v1192 = vunpack.c.l.b16 %v1057
  %v1193 = vunpack.c.l.b16 %v1058
  %v1194 = vunpack.c.l.b16 %v1059
  %v1195 = vunpack.c.l.b16 %v1060
  %v1196 = vunpack.c.l.b16 %v1061
  %v1197 = vunpack.c.l.b16 %v1062
  %v1198 = vunpack.c.l.b16 %v1063
  %v1199 = vunpack.c.l.b16 %v1064
  %v1200 = vunpack.c.l.b16 %v1065
  %v1201 = vunpack.c.l.b16 %v1066
  %v1202 = vunpack.c.l.b16 %v1067
  %v1203 = vunpack.c.l.b16 %v1068
  %v1204 = vunpack.c.l.b16 %v1069
  %v1205 = vunpack.c.l.b16 %v1070
  %v1206 = vunpack.c.l.b16 %v1071
  %v1207 = vunpack.c.l.b16 %v1072
  %v1208 = vunpack.c.l.b16 %v1073
  %v1209 = vunpack.c.l.b16 %v1074
  %v1210 = vunpack.c.l.b16 %v1075
  %v1211 = vunpack.c.l.b16 %v1076
  %v1212 = vunpack.c.l.b16 %v1077
  %v1213 = vunpack.c.l.b16 %v1078
  %v1214 = vunpack.c.l.b16 %v1079
  %v1215 = vunpack.c.l.b16 %v1080
  %v1216 = vunpack.c.l.b16 %v1081
  %v1217 = vunpack.c.l.b16 %v1082
  %v1218 = vunpack.c.l.b16 %v1083
  %v1219 = vunpack.c.l.b16 %v1084
  %v1220 = vunpack.c.l.b16 %v1085
  %v1221 = vunpack.c.l.b16 %v1086
  %v1222 = vunpack.c.l.b16 %v1087
  %v1223 = vpack.c.b16 %v1160, %v1159
  %v1224 = vpack.c.b16 %v1162, %v1161
  %v1225 = vpack.c.b16 %v1164, %v1163
  %v1226 = vpack.c.b16 %v1166, %v1165
  %v1227 = vpack.c.b16 %v1168, %v1167
  %v1228 = vpack.c.b16 %v1170, %v1169
  %v1229 = vpack.c.b16 %v1172, %v1171
  %v1230 = vpack.c.b16 %v1174, %v1173
  %v1231 = vpack.c.b16 %v1176, %v1175
  %v1232 = vpack.c.b16 %v1178, %v1177
  %v1233 = vpack.c.b16 %v1180, %v1179
  %v1234 = vpack.c.b16 %v1182, %v1181
  %v1235 = vpack.c.b16 %v1184, %v1183
  %v1236 = vpack.c.b16 %v1186, %v1185
  %v1237 = vpack.c.b16 %v1188, %v1187
  %v1238 = vpack.c.b16 %v1190, %v1189
  %v1239 = vpack.c.b16 %v1192, %v1191
  %v1240 = vpack.c.b16 %v1194, %v1193
  %v1241 = vpack.c.b16 %v1196, %v1195
  %v1242 = vpack.c.b16 %v1198, %v1197
  %v1243 = vpack.c.b16 %v1200, %v1199
  %v1244 = vpack.c.b16 %v1202, %v1201
  %v1245 = vpack.c.b16 %v1204, %v1203
  %v1246 = vpack.c.b16 %v1206, %v1205
  %v1247 = vpack.c.b16 %v1208, %v1207
  %v1248 = vpack.c.b16 %v1210, %v1209
  %v1249 = vpack.c.b16 %v1212, %v1211
  %v1250 = vpack.c.b16 %v1214, %v1213
  %v1251 = vpack.c.b16 %v1216, %v1215
  %v1252 = vpack.c.b16 %v1218, %v1217
  %v1253 = vpack.c.b16 %v1220, %v1219
  %v1254 = vpack.c.b16 %v1222, %v1221
  %1287 = vmatprep.subr.bf16.mxu0 0
  %1288 = vmatpush1.bf16.msra.mxu0 %v1223
  %1289 = vmatprep.subr.bf16.mxu0 0
  %1290 = vmatpush1.bf16.msra.mxu0 %v1224
  %1291 = vmatprep.subr.bf16.mxu0 0
  %1292 = vmatpush1.bf16.msra.mxu0 %v1225
  %1293 = vmatprep.subr.bf16.mxu0 0
  %1294 = vmatpush1.bf16.msra.mxu0 %v1226
  %1295 = vmatprep.subr.bf16.mxu0 0
  %1296 = vmatpush1.bf16.msra.mxu0 %v1227
  %1297 = vmatprep.subr.bf16.mxu0 0
  %1298 = vmatpush1.bf16.msra.mxu0 %v1228
  %1299 = vmatprep.subr.bf16.mxu0 0
  %1300 = vmatpush1.bf16.msra.mxu0 %v1229
  %1301 = vmatprep.subr.bf16.mxu0 0
  %1302 = vmatpush1.bf16.msra.mxu0 %v1230
  %1303 = vmatprep.subr.bf16.mxu0 0
  %1304 = vmatpush1.bf16.msra.mxu0 %v1231
  %1305 = vmatprep.subr.bf16.mxu0 0
  %1306 = vmatpush1.bf16.msra.mxu0 %v1232
  %1307 = vmatprep.subr.bf16.mxu0 0
  %1308 = vmatpush1.bf16.msra.mxu0 %v1233
  %1309 = vmatprep.subr.bf16.mxu0 0
  %1310 = vmatpush1.bf16.msra.mxu0 %v1234
  %1311 = vmatprep.subr.bf16.mxu0 0
  %1312 = vmatpush1.bf16.msra.mxu0 %v1235
  %1313 = vmatprep.subr.bf16.mxu0 0
  %1314 = vmatpush1.bf16.msra.mxu0 %v1236
  %1315 = vmatprep.subr.bf16.mxu0 0
  %1316 = vmatpush1.bf16.msra.mxu0 %v1237
  %1317 = vmatprep.subr.bf16.mxu0 0
  %1318 = vmatpush1.bf16.msra.mxu0 %v1238
  %1319 = vmatprep.mubr.bf16.mxu0 %v1021
  %1320 = vmatmul.mubr.bf16.gmra.mrb[0].mxu0 %v1020
  %v1321 = vpop.f32.mrb[0].mxu0
  %v1322 = vadd.f32 %v1093, %v1321
  %v1323 = vpop.f32.mrb[0].mxu0
  %v1324 = vpop.f32.mrb[0].mxu0
  %v1325 = vadd.f32 %v1093, %v1324
  %v1326 = vpop.f32.mrb[0].mxu0
  %1327 = vdwg.mxu0
  %1328 = vmatprep.subr.bf16.mxu0 0
  %1329 = vmatpush1.bf16.msra.mxu0 %v1239
  %1330 = vmatprep.subr.bf16.mxu0 0
  %1331 = vmatpush1.bf16.msra.mxu0 %v1240
  %1332 = vmatprep.subr.bf16.mxu0 0
  %1333 = vmatpush1.bf16.msra.mxu0 %v1241
  %1334 = vmatprep.subr.bf16.mxu0 0
  %1335 = vmatpush1.bf16.msra.mxu0 %v1242
  %1336 = vmatprep.subr.bf16.mxu0 0
  %1337 = vmatpush1.bf16.msra.mxu0 %v1243
  %1338 = vmatprep.subr.bf16.mxu0 0
  %1339 = vmatpush1.bf16.msra.mxu0 %v1244
  %1340 = vmatprep.subr.bf16.mxu0 0
  %1341 = vmatpush1.bf16.msra.mxu0 %v1245
  %1342 = vmatprep.subr.bf16.mxu0 0
  %1343 = vmatpush1.bf16.msra.mxu0 %v1246
  %1344 = vmatprep.subr.bf16.mxu0 0
  %1345 = vmatpush1.bf16.msra.mxu0 %v1247
  %1346 = vmatprep.subr.bf16.mxu0 0
  %1347 = vmatpush1.bf16.msra.mxu0 %v1248
  %1348 = vmatprep.subr.bf16.mxu0 0
  %1349 = vmatpush1.bf16.msra.mxu0 %v1249
  %1350 = vmatprep.subr.bf16.mxu0 0
  %1351 = vmatpush1.bf16.msra.mxu0 %v1250
  %1352 = vmatprep.subr.bf16.mxu0 0
  %1353 = vmatpush1.bf16.msra.mxu0 %v1251
  %1354 = vmatprep.subr.bf16.mxu0 0
  %1355 = vmatpush1.bf16.msra.mxu0 %v1252
  %1356 = vmatprep.subr.bf16.mxu0 0
  %1357 = vmatpush1.bf16.msra.mxu0 %v1253
  %1358 = vmatprep.subr.bf16.mxu0 0
  %1359 = vmatpush1.bf16.msra.mxu0 %v1254
  %1360 = vmatprep.mubr.bf16.mxu0 %v1023
  %1361 = vmatmul.mubr.bf16.gmra.mrb[0].mxu0 %v1022
  %v1362 = vpop.f32.mrb[0].mxu0
  %v1363 = vadd.f32 %v1322, %v1362
  %v1364 = vpop.f32.mrb[0].mxu0
  %v1365 = vpop.f32.mrb[0].mxu0
  %v1366 = vadd.f32 %v1325, %v1365
  %v1367 = vpop.f32.mrb[0].mxu0
  %1368 = vdwg.mxu0
  %1369 = vst [vmem:[%s6] sm:$0xff] %v1363
  %1370 = vst [vmem:[%s6 + $0x8] sm:$0xff] %v1366
  // Predicated region
  $region26: #{cross_attention_forward.1} parent=0 // pred_check
    _
  $region27: #{cross_attention_forward.1} parent=0 // pred_check_branch
    %1372 = sbr.rel (0) target = $region29
  $region28: #{cross_attention_forward.1} parent=0 // pred_region
    _
  $region29: #{cross_attention_forward.1} parent=0 // pred_fallthru
    _
  // Predicated region
  $region30: #{cross_attention_forward.1} parent=0 // pred_check
    _
  $region31: #{cross_attention_forward.1} parent=0 // pred_check_branch
    %1374 = sbr.rel (0) target = $region33
  $region32: #{cross_attention_forward.1} parent=0 // pred_region
    _
  $region33: #{cross_attention_forward.1} parent=0 // pred_fallthru
    _

</llo_original>
